<compile_context>
chip_gen: v5e
topology: v5e:2x2
jax: 0.10.0
libtpu: 0.0.40
codegen_flags: <defaults>
</compile_context>

<pallas_src>
import jax
import jax.numpy as jnp
from jax.experimental import pallas as pl
from jax.experimental.pallas import tpu as pltpu

# ----------------------------- hyper-parameters ------------------------------
D_IN = 32          # input_dim
K    = 8           # mixture_components
ZD   = 8           # z_dim
H0, H1 = 64, 32    # hidden_dims

LANES = 128

# input-slab lane layout: [ x | y | eps | zero pad ]
L_X, L_Y, L_EPS = 0, D_IN, D_IN + K            # 0, 32, 40
# output-slab lane layout: [ z | mu | log_sigma | zero pad ]
L_Z, L_MU, L_LS = 0, ZD, 2 * ZD                # 0, 8, 16

B_TOTAL = 512      # total batch  -> grid of 2 steps (keeps both v7x TCs busy)
TILE_B  = 256      # batch tile (fills 256-wide MXU M dimension on v6e/v7x)


# --------------------------------- kernel ------------------------------------
def encoder_kernel(in_ref, w_ref, b_ref, out_ref):
    def softplus(t):  # matches torch.nn.Softplus (beta=1, threshold=20)
        return jnp.where(t > 20.0, t, jnp.log1p(jnp.exp(jnp.minimum(t, 20.0))))

    xs = in_ref[...]                                   # (TILE_B, 128) [x|y|eps|0]

    # Static, tile-aligned views into the resident packed slabs.
    w1  = w_ref[0 * LANES:1 * LANES, :]                # (128, 128) hidden1 (concat folded)
    w2  = w_ref[1 * LANES:2 * LANES, :]                # (128, 128) hidden2
    wms = w_ref[2 * LANES:3 * LANES, :]                # (128, 128) fused mu | log_sigma head
    b1  = b_ref[0:1, :]
    b2  = b_ref[1:2, :]
    bms = b_ref[2:3, :]

    # hidden1(cat(x, y)): eps / pad lanes hit zero weight rows, so the full-width
    # dot is exactly the concat matmul.  ReLU preserves the zero lane pad.
    h1 = jnp.maximum(jnp.dot(xs, w1, preferred_element_type=jnp.float32) + b1, 0.0)
    # TODO(synk): dropout is identity (eval mode); training-mode dropout would
    #             need pltpu.prng_* masking.
    h2 = jnp.maximum(jnp.dot(h1, w2, preferred_element_type=jnp.float32) + b2, 0.0)

    # Fused head: result lanes already match the packed output layout
    # (mu @ [L_MU, L_MU+ZD), raw log_sigma @ [L_LS, L_LS+ZD), zeros elsewhere).
    h_ms = jnp.dot(h2, wms, preferred_element_type=jnp.float32) + bms

    lane  = jax.lax.broadcasted_iota(jnp.int32, h_ms.shape, 1)
    is_ls = (lane >= L_LS) & (lane < L_LS + ZD)
    is_z  = lane < L_Z + ZD

    # softplus only on the log_sigma lanes (EUP slot); mu lanes & zero pad pass through.
    mu_ls = jnp.where(is_ls, softplus(h_ms), h_ms)

    # Lane-align mu, log_sigma and eps under the z lanes via XLU rotations
    # (no narrow slices / concatenates on the VPU).
    mu_al  = pltpu.roll(mu_ls, LANES - L_MU, axis=1)   # mu        -> lanes 0:ZD
    ls_al  = pltpu.roll(mu_ls, LANES - L_LS, axis=1)   # log_sigma -> lanes 0:ZD
    eps_al = pltpu.roll(xs,    LANES - L_EPS, axis=1)  # eps       -> lanes 0:ZD

    # reparameterization: z = mu + exp(0.5 * log_sigma) * eps   (valid on lanes 0:ZD)
    z_full = mu_al + jnp.exp(0.5 * ls_al) * eps_al

    # Single unmasked, lane-dense (TILE_B, 128) store: [z | mu | log_sigma | 0].
    out_ref[...] = jnp.where(is_z, z_full, mu_ls)


# ------------------------------- parameters ----------------------------------
def _linear(key, fan_in, fan_out):
    """PyTorch nn.Linear default init, weight returned pre-transposed (in, out)."""
    kw, kb = jax.random.split(key)
    bound = 1.0 / (fan_in ** 0.5)
    w = jax.random.uniform(kw, (fan_in, fan_out), jnp.float32, -bound, bound)
    b = jax.random.uniform(kb, (fan_out,), jnp.float32, -bound, bound)
    return w, b


def init_params(key):
    k1, k2, k3, k4 = jax.random.split(key, 4)
    w1, b1   = _linear(k1, D_IN + K, H0)   # hidden1 on cat(x, y)
    w2, b2   = _linear(k2, H0, H1)         # hidden2
    wmu, bmu = _linear(k3, H1, ZD)         # nn_mu
    wls, bls = _linear(k4, H1, ZD)         # nn_log_sigma
    raw = (w1, b1, w2, b2, wmu, bmu, wls, bls)

    # Three full 128x128 zero-padded weight blocks stacked in one resident slab.
    wslab = jnp.zeros((3 * LANES, LANES), jnp.float32)
    wslab = wslab.at[0:D_IN + K, 0:H0].set(w1)                          # block 0: hidden1
    wslab = wslab.at[LANES:LANES + H0, 0:H1].set(w2)                    # block 1: hidden2
    wslab = wslab.at[2 * LANES:2 * LANES + H1, L_MU:L_MU + ZD].set(wmu) # block 2: mu
    wslab = wslab.at[2 * LANES:2 * LANES + H1, L_LS:L_LS + ZD].set(wls) # block 2: log_sigma

    bslab = jnp.zeros((8, LANES), jnp.float32)
    bslab = bslab.at[0, 0:H0].set(b1)
    bslab = bslab.at[1, 0:H1].set(b2)
    bslab = bslab.at[2, L_MU:L_MU + ZD].set(bmu)
    bslab = bslab.at[2, L_LS:L_LS + ZD].set(bls)
    return raw, wslab, bslab


# -------------------------------- wrapper -------------------------------------
def encoder_forward(x, y, eps, wslab, bslab, *, tile_b=TILE_B):
    B = x.shape[0]
    assert B % tile_b == 0, "batch must be a multiple of the batch tile"
    grid = (B // tile_b,)

    # One lane-dense input slab -> one DMA per grid step for x, y and eps.
    in_slab = jnp.zeros((B, LANES), jnp.float32)
    in_slab = in_slab.at[:, L_X:L_X + D_IN].set(x)
    in_slab = in_slab.at[:, L_Y:L_Y + K].set(y)
    in_slab = in_slab.at[:, L_EPS:L_EPS + ZD].set(eps)

    packed = pl.pallas_call(
        encoder_kernel,
        out_shape=jax.ShapeDtypeStruct((B, LANES), jnp.float32),
        grid_spec=pltpu.PrefetchScalarGridSpec(
            num_scalar_prefetch=0,
            grid=grid,
            in_specs=[
                pl.BlockSpec((tile_b, LANES), lambda i: (i, 0)),       # input slab (streamed)
                pl.BlockSpec((3 * LANES, LANES), lambda i: (0, 0)),    # weight slab (resident)
                pl.BlockSpec((8, LANES), lambda i: (0, 0)),            # bias slab (resident)
            ],
            out_specs=pl.BlockSpec((tile_b, LANES), lambda i: (i, 0)),
        ),
        compiler_params=pltpu.CompilerParams(
            dimension_semantics=("parallel",)),
    )(in_slab, wslab, bslab)

    # A downstream consumer could take `packed` directly; slices here are only
    # for the reference comparison in __main__.
    z           = packed[:, L_Z:L_Z + ZD]
    z_mu        = packed[:, L_MU:L_MU + ZD]
    z_log_sigma = packed[:, L_LS:L_LS + ZD]
    return z, z_mu, z_log_sigma


# ------------------------------ pure-JAX reference ----------------------------
def encoder_ref(x, y, eps, raw):
    w1, b1, w2, b2, wmu, bmu, wls, bls = raw
    xy = jnp.concatenate([x, y], axis=1)
    h1 = jax.nn.relu(xy @ w1 + b1)
    h2 = jax.nn.relu(h1 @ w2 + b2)
    z_mu = h2 @ wmu + bmu
    z_log_sigma = jax.nn.softplus(h2 @ wls + bls)
    z = z_mu + jnp.exp(0.5 * z_log_sigma) * eps
    return z, z_mu, z_log_sigma


# ---------------------------------- main --------------------------------------
if __name__ == "__main__":
    key = jax.random.PRNGKey(0)
    kx, ky, keps, kp = jax.random.split(key, 4)

    x = jax.random.normal(kx, (B_TOTAL, D_IN), jnp.float32)
    # y: soft mixture assignment (rows sum to 1), as produced by encoder_y upstream
    y = jax.nn.softmax(jax.random.normal(ky, (B_TOTAL, K), jnp.float32), axis=-1)
    eps = jax.random.normal(keps, (B_TOTAL, ZD), jnp.float32)
    raw, wslab, bslab = init_params(kp)

    z, z_mu, z_ls = jax.block_until_ready(encoder_forward(x, y, eps, wslab, bslab))
    zr, zmur, zlsr = encoder_ref(x, y, eps, raw)

    assert z.shape == (B_TOTAL, ZD) and z_mu.shape == (B_TOTAL, ZD)
    assert z_ls.shape == (B_TOTAL, ZD)
    assert bool(jnp.all(jnp.isfinite(z)))
    assert bool(jnp.allclose(z, zr, rtol=1e-4, atol=1e-5))
    assert bool(jnp.allclose(z_mu, zmur, rtol=1e-4, atol=1e-5))
    assert bool(jnp.allclose(z_ls, zlsr, rtol=1e-4, atol=1e-5))
    print("KERNEL_OK")
</pallas_src>

<mosaic_0001>
module attributes {stable_mosaic.version = 11 : i64} {
  func.func @encoder_kernel(%arg0: i32, %arg1: memref<256x128xf32, #tpu.memory_space<vmem>>, %arg2: memref<384x128xf32, #tpu.memory_space<vmem>>, %arg3: memref<8x128xf32, #tpu.memory_space<vmem>>, %arg4: memref<256x128xf32, #tpu.memory_space<vmem>>) attributes {dimension_semantics = [#tpu.dimension_semantics<parallel>], iteration_bounds = array<i64: 2>, scalar_prefetch = 0 : i64, scratch_operands = 0 : i64, tpu.core_type = #tpu.core_type<tc>, window_params = [{transform_indices = @transform_0, window_bounds = array<i64: 256, 128>}, {pipeline_mode = #tpu.pipeline_mode<synchronous>, transform_indices = @transform_1, window_bounds = array<i64: 384, 128>}, {pipeline_mode = #tpu.pipeline_mode<synchronous>, transform_indices = @transform_2, window_bounds = array<i64: 8, 128>}, {transform_indices = @transform_3, window_bounds = array<i64: 256, 128>}]} {
    %c0 = arith.constant 0 : index
    %c0_0 = arith.constant 0 : index
    %0 = vector.load %arg1[%c0, %c0_0] : memref<256x128xf32, #tpu.memory_space<vmem>>, vector<256x128xf32>
    %c0_1 = arith.constant 0 : index
    %c0_2 = arith.constant 0 : index
    %1 = vector.load %arg2[%c0_1, %c0_2] : memref<384x128xf32, #tpu.memory_space<vmem>>, vector<128x128xf32>
    %c128 = arith.constant 128 : index
    %c0_3 = arith.constant 0 : index
    %2 = vector.load %arg2[%c128, %c0_3] : memref<384x128xf32, #tpu.memory_space<vmem>>, vector<128x128xf32>
    %c256 = arith.constant 256 : index
    %c0_4 = arith.constant 0 : index
    %3 = vector.load %arg2[%c256, %c0_4] : memref<384x128xf32, #tpu.memory_space<vmem>>, vector<128x128xf32>
    %c0_5 = arith.constant 0 : index
    %c0_6 = arith.constant 0 : index
    %4 = vector.load %arg3[%c0_5, %c0_6] : memref<8x128xf32, #tpu.memory_space<vmem>>, vector<1x128xf32>
    %c1 = arith.constant 1 : index
    %c0_7 = arith.constant 0 : index
    %5 = vector.load %arg3[%c1, %c0_7] : memref<8x128xf32, #tpu.memory_space<vmem>>, vector<1x128xf32>
    %c2 = arith.constant 2 : index
    %c0_8 = arith.constant 0 : index
    %6 = vector.load %arg3[%c2, %c0_8] : memref<8x128xf32, #tpu.memory_space<vmem>>, vector<1x128xf32>
    %cst = arith.constant dense<0.000000e+00> : vector<256x128xf32>
    %7 = tpu.matmul %0, %1, %cst {dimension_numbers = #tpu.dot_dimension_numbers<[1], [0], [0], [1], [0, 0, 1, 1], [], []>} : vector<256x128xf32>, vector<128x128xf32>, vector<256x128xf32> -> vector<256x128xf32>
    %8 = vector.broadcast %4 : vector<1x128xf32> to vector<256x128xf32>
    %9 = arith.addf %7, %8 : vector<256x128xf32>
    %cst_9 = arith.constant 0.000000e+00 : f32
    %10 = vector.broadcast %cst_9 : f32 to vector<256x128xf32>
    %11 = arith.maximumf %9, %10 : vector<256x128xf32>
    %cst_10 = arith.constant dense<0.000000e+00> : vector<256x128xf32>
    %12 = tpu.matmul %11, %2, %cst_10 {dimension_numbers = #tpu.dot_dimension_numbers<[1], [0], [0], [1], [0, 0, 1, 1], [], []>} : vector<256x128xf32>, vector<128x128xf32>, vector<256x128xf32> -> vector<256x128xf32>
    %13 = vector.broadcast %5 : vector<1x128xf32> to vector<256x128xf32>
    %14 = arith.addf %12, %13 : vector<256x128xf32>
    %cst_11 = arith.constant 0.000000e+00 : f32
    %15 = vector.broadcast %cst_11 : f32 to vector<256x128xf32>
    %16 = arith.maximumf %14, %15 : vector<256x128xf32>
    %cst_12 = arith.constant dense<0.000000e+00> : vector<256x128xf32>
    %17 = tpu.matmul %16, %3, %cst_12 {dimension_numbers = #tpu.dot_dimension_numbers<[1], [0], [0], [1], [0, 0, 1, 1], [], []>} : vector<256x128xf32>, vector<128x128xf32>, vector<256x128xf32> -> vector<256x128xf32>
    %18 = vector.broadcast %6 : vector<1x128xf32> to vector<256x128xf32>
    %19 = arith.addf %17, %18 : vector<256x128xf32>
    %20 = tpu.iota {dimensions = array<i32: 1>} : vector<256x128xi32>
    %c16_i32 = arith.constant 16 : i32
    %21 = vector.broadcast %c16_i32 : i32 to vector<256x128xi32>
    %22 = arith.cmpi sge, %20, %21 : vector<256x128xi32>
    %c24_i32 = arith.constant 24 : i32
    %23 = vector.broadcast %c24_i32 : i32 to vector<256x128xi32>
    %24 = arith.cmpi slt, %20, %23 : vector<256x128xi32>
    %25 = arith.andi %22, %24 : vector<256x128xi1>
    %c8_i32 = arith.constant 8 : i32
    %26 = vector.broadcast %c8_i32 : i32 to vector<256x128xi32>
    %27 = arith.cmpi slt, %20, %26 : vector<256x128xi32>
    %cst_13 = arith.constant 2.000000e+01 : f32
    %28 = vector.broadcast %cst_13 : f32 to vector<256x128xf32>
    %29 = arith.cmpf ogt, %19, %28 : vector<256x128xf32>
    %cst_14 = arith.constant 2.000000e+01 : f32
    %30 = vector.broadcast %cst_14 : f32 to vector<256x128xf32>
    %31 = arith.minimumf %19, %30 : vector<256x128xf32>
    %32 = math.exp %31 : vector<256x128xf32>
    %33 = math.log1p %32 : vector<256x128xf32>
    %34 = arith.select %29, %19, %33 : vector<256x128xi1>, vector<256x128xf32>
    %35 = arith.select %25, %34, %19 : vector<256x128xi1>, vector<256x128xf32>
    %c120_i32 = arith.constant 120 : i32
    %36 = tpu.dynamic_rotate %35 by %c120_i32 dim 1 : vector<256x128xf32>, i32 -> vector<256x128xf32>
    %c112_i32 = arith.constant 112 : i32
    %37 = tpu.dynamic_rotate %35 by %c112_i32 dim 1 : vector<256x128xf32>, i32 -> vector<256x128xf32>
    %c88_i32 = arith.constant 88 : i32
    %38 = tpu.dynamic_rotate %0 by %c88_i32 dim 1 : vector<256x128xf32>, i32 -> vector<256x128xf32>
    %cst_15 = arith.constant 5.000000e-01 : f32
    %39 = vector.broadcast %cst_15 : f32 to vector<256x128xf32>
    %40 = arith.mulf %39, %37 : vector<256x128xf32>
    %41 = math.exp %40 : vector<256x128xf32>
    %42 = arith.mulf %41, %38 : vector<256x128xf32>
    %43 = arith.addf %36, %42 : vector<256x128xf32>
    %44 = arith.select %27, %43, %35 : vector<256x128xi1>, vector<256x128xf32>
    %c0_16 = arith.constant 0 : index
    %c0_17 = arith.constant 0 : index
    %45 = vector.load %arg4[%c0_16, %c0_17] : memref<256x128xf32, #tpu.memory_space<vmem>>, vector<256x128xf32>
    tpu.vector_store %arg4[%c0_16, %c0_17], %44 {strides = array<i32>} : memref<256x128xf32, #tpu.memory_space<vmem>>, vector<256x128xf32>,
    return
  }
  func.func @transform_0(%arg0: i32) -> (i32, i32) {
    %c0_i32 = arith.constant 0 : i32
    %c0_i32_0 = arith.constant 0 : i32
    return %arg0, %c0_i32 : i32, i32
  }
  func.func @transform_1(%arg0: i32) -> (i32, i32) {
    %c0_i32 = arith.constant 0 : i32
    %c0_i32_0 = arith.constant 0 : i32
    %c0_i32_1 = arith.constant 0 : i32
    return %c0_i32, %c0_i32_0 : i32, i32
  }
  func.func @transform_2(%arg0: i32) -> (i32, i32) {
    %c0_i32 = arith.constant 0 : i32
    %c0_i32_0 = arith.constant 0 : i32
    %c0_i32_1 = arith.constant 0 : i32
    return %c0_i32, %c0_i32_0 : i32, i32
  }
  func.func @transform_3(%arg0: i32) -> (i32, i32) {
    %c0_i32 = arith.constant 0 : i32
    %c0_i32_0 = arith.constant 0 : i32
    return %arg0, %c0_i32 : i32, i32
  }
}

</mosaic_0001>

<llo_original>
// kernel: tpu_custom_call.1
$region0: #{tpu_custom_call.1}
  #allocation0 [shape = 'u32[]', space=smem, size = 0x4, offset = 0x4, fixed_abs, tag = 'smem constant byte address 0x4 - core index']
  #allocation1 [shape = 'u32[72,128]{1,0:T(1,128)}', space=vmem, size = 0x9000, scoped, tag = 'internal scratch']
  %s0 = inlined_call_operand.hbm [shape: f32[512,128], index: 0, kind: input, shape index: {}]
  %s1 = inlined_call_operand.hbm [shape: f32[384,128], index: 1, kind: input, shape index: {}]
  %s2 = inlined_call_operand.hbm [shape: f32[8,128], index: 2, kind: input, shape index: {}]
  %s3 = inlined_call_operand.hbm [shape: f32[512,128], index: 3, kind: output, shape index: {}]
  %s4 = sld [smem:[#allocation0]]
  $region57: #{tpu_custom_call.1} parent=0
    _
  %s6 = ssub.s32 1, %s4
  %s7 = scalar_select 0, %s6, %s4
  $region1: #{tpu_custom_call.1} parent=0
    #allocation2 [shape = 'u8[262144]{0}', space=vmem, size = 0x40000, scoped, tag = 'input window, operand 0']
    #allocation3 [shape = 's32[2]{0}', space=sflag, size = 0x8, scoped, tag = 'scoped memory for tpu_custom_call.1']
    #allocation4 [shape = 's32[2]{0}', space=sflag, size = 0x8, scoped, tag = 'scoped memory for tpu_custom_call.1']
    #allocation5 [shape = 'u8[196608]{0}', space=vmem, size = 0x30000, scoped, tag = 'input window, operand 1, single buffered']
    #allocation6 [shape = 's32[1]{0}', space=sflag, size = 0x4, scoped, tag = 'scoped memory for tpu_custom_call.1']
    #allocation7 [shape = 'u8[4096]{0}', space=vmem, size = 0x1000, scoped, tag = 'input window, operand 2, single buffered']
    #allocation8 [shape = 'u8[262144]{0}', space=vmem, size = 0x40000, scoped, tag = 'output window, operand 0']
    %8 = vsyncpa [#allocation3], 0
    %s9 = scalar_lea.sflag [#allocation3], 1
    %10 = vsyncpa %s9, 0
    %11 = vsyncpa [#allocation6], 0
    %12 = vsyncpa [#allocation4], 0
    %s13 = scalar_lea.sflag [#allocation4], 1
    %14 = vsyncpa %s13, 0
    loop: start=0, step=1, limit=4
    $region2: #{tpu_custom_call.1} parent=1 // loop_pre_header
      _
    $region3: #{tpu_custom_call.1} parent=1 // loop_header
      %s16 = sphi 0, %s20
      %p17 = scmp.ge.s32.totalorder %s16, 4
      %s26 = sphi 0, %s28
      %s29 = sphi 0, %s26
      %s30 = sphi 0, %s29
      %s46 = sphi 0, %s30
      %s50 = sphi 0, %s50
      %s52 = sphi 0, %s50
      %s53 = sphi 0, %s52
      %s67 = sphi 0, %s53
      %s71 = sphi 0, %s71
      %s73 = sphi 0, %s71
      %s74 = sphi 0, %s73
      %s88 = sphi 0, %s74
      %s94 = sphi 0, %s96
      %s97 = sphi 0, %s94
      %s98 = sphi 0, %s97
      %s114 = sphi 0, %s98
    $region4: #{tpu_custom_call.1} parent=1 // loop_header_branch
      %19 = sbr.rel (%p17) target = $region8
    $region5: #{tpu_custom_call.1} parent=1 // loop_body
      %s21 = ssub.s32 %s16, 1
      %s22 = ssub.s32 %s16, 2
      %s23 = sadd.s32 %s16, 1
      %s24 = ssub.s32 %s16, %s23
      %p25 = scmp.eq.s32.totalorder %s24, 0
      %s27 = sadd.s32 %s26, 1
      %s28 = scalar_select %p25, %s26, %s27
      %p31 = pneg %p25
      %p32 = scmp.eq.s32.totalorder %s16, 1
      %p33 = por %p31, %p32
      %p34 = scmp.ne.s32.totalorder %s26, %s29
      %p35 = scmp.eq.s32.totalorder %s16, 0
      %p36 = por %p34, %p35
      %p37 = scmp.ne.s32.totalorder %s26, %s29
      %p38 = scmp.eq.s32.totalorder %s21, 1
      %p39 = por %p37, %p38
      %p40 = scmp.ne.s32.totalorder %s29, %s30
      %p41 = scmp.eq.s32.totalorder %s21, 0
      %p42 = por %p40, %p41
      %p43 = scmp.ne.s32.totalorder %s29, %s30
      %p44 = scmp.eq.s32.totalorder %s22, 1
      %p45 = por %p43, %p44
      %p47 = scmp.ne.s32.totalorder %s30, %s46
      %p48 = scmp.eq.s32.totalorder %s22, 0
      %p49 = por %p47, %p48
      %s51 = sadd.s32 %s50, 1
      %p54 = scmp.eq.s32.totalorder %s16, 1
      %p55 = scmp.ne.s32.totalorder %s50, %s52
      %p56 = scmp.eq.s32.totalorder %s16, 0
      %p57 = por %p55, %p56
      %p58 = scmp.ne.s32.totalorder %s50, %s52
      %p59 = scmp.eq.s32.totalorder %s21, 1
      %p60 = por %p58, %p59
      %p61 = scmp.ne.s32.totalorder %s52, %s53
      %p62 = scmp.eq.s32.totalorder %s21, 0
      %p63 = por %p61, %p62
      %p64 = scmp.ne.s32.totalorder %s52, %s53
      %p65 = scmp.eq.s32.totalorder %s22, 1
      %p66 = por %p64, %p65
      %p68 = scmp.ne.s32.totalorder %s53, %s67
      %p69 = scmp.eq.s32.totalorder %s22, 0
      %p70 = por %p68, %p69
      %s72 = sadd.s32 %s71, 1
      %p75 = scmp.eq.s32.totalorder %s16, 1
      %p76 = scmp.ne.s32.totalorder %s71, %s73
      %p77 = scmp.eq.s32.totalorder %s16, 0
      %p78 = por %p76, %p77
      %p79 = scmp.ne.s32.totalorder %s71, %s73
      %p80 = scmp.eq.s32.totalorder %s21, 1
      %p81 = por %p79, %p80
      %p82 = scmp.ne.s32.totalorder %s73, %s74
      %p83 = scmp.eq.s32.totalorder %s21, 0
      %p84 = por %p82, %p83
      %p85 = scmp.ne.s32.totalorder %s73, %s74
      %p86 = scmp.eq.s32.totalorder %s22, 1
      %p87 = por %p85, %p86
      %p89 = scmp.ne.s32.totalorder %s74, %s88
      %p90 = scmp.eq.s32.totalorder %s22, 0
      %p91 = por %p89, %p90
      %s92 = ssub.s32 %s16, %s23
      %p93 = scmp.eq.s32.totalorder %s92, 0
      %s95 = sadd.s32 %s94, 1
      %s96 = scalar_select %p93, %s94, %s95
      %p99 = pneg %p93
      %p100 = scmp.eq.s32.totalorder %s16, 1
      %p101 = por %p99, %p100
      %p102 = scmp.ne.s32.totalorder %s94, %s97
      %p103 = scmp.eq.s32.totalorder %s16, 0
      %p104 = por %p102, %p103
      %p105 = scmp.ne.s32.totalorder %s94, %s97
      %p106 = scmp.eq.s32.totalorder %s21, 1
      %p107 = por %p105, %p106
      %p108 = scmp.ne.s32.totalorder %s97, %s98
      %p109 = scmp.eq.s32.totalorder %s21, 0
      %p110 = por %p108, %p109
      %p111 = scmp.ne.s32.totalorder %s97, %s98
      %p112 = scmp.eq.s32.totalorder %s22, 1
      %p113 = por %p111, %p112
      %p115 = scmp.ne.s32.totalorder %s98, %s114
      %p116 = scmp.eq.s32.totalorder %s22, 0
      %p117 = por %p115, %p116
      %p118 = scmp.le.s32.totalorder 1, %s16
      %p119 = scmp.lt.s32.totalorder %s16, 3
      %p120 = pnand %p118, %p119
      %p121 = pneg %p120
      // Predicated region
      $region9: #{tpu_custom_call.1} parent=5 // pred_check
        _
      $region10: #{tpu_custom_call.1} parent=5 // pred_check_branch
        %123 = sbr.rel (%p120) target = $region12
      $region11: #{tpu_custom_call.1} parent=5 // pred_region
        %s124 = ssub.s32 %s16, 1
        // Predicated region
        $region13: #{tpu_custom_call.1} parent=11 // pred_check
          %p125 = pneg %p63
        $region14: #{tpu_custom_call.1} parent=11 // pred_check_branch
          %127 = sbr.rel (%p125) target = $region16
        $region15: #{tpu_custom_call.1} parent=11 // pred_region
          %129 = vsyncadd [#allocation6], 0
          %s130 = sshll.u32 %s1, 4
          %s131 = int_to_ptr.hbm [resolvable:$true] %s130
          %s132 = sshll.u32 [#allocation5], 4
          %s133 = int_to_ptr.vmem [resolvable:$true] %s132
          %138 = dma.hbm_to_vmem [thread:$0]  %s131, 6144, %s133, [#allocation6], 128, 128, 8
        $region16: #{tpu_custom_call.1} parent=11 // pred_fallthru
          _
        // Predicated region
        $region17: #{tpu_custom_call.1} parent=11 // pred_check
          %p139 = pneg %p84
        $region18: #{tpu_custom_call.1} parent=11 // pred_check_branch
          %141 = sbr.rel (%p139) target = $region20
        $region19: #{tpu_custom_call.1} parent=11 // pred_region
          %143 = vsyncadd [#allocation6], 0
          %s145 = sshll.u32 %s2, 4
          %s146 = int_to_ptr.hbm [resolvable:$true] %s145
          %s147 = sshll.u32 [#allocation7], 4
          %s148 = int_to_ptr.vmem [resolvable:$true] %s147
          %150 = dma.hbm_to_vmem [thread:$0]  %s146, 128, %s148, [#allocation6]
        $region20: #{tpu_custom_call.1} parent=11 // pred_fallthru
          _
      $region12: #{tpu_custom_call.1} parent=5 // pred_fallthru
        _
      %p151 = scmp.lt.s32.totalorder %s16, 2
      // Predicated region
      $region21: #{tpu_custom_call.1} parent=5 // pred_check
        %p152 = pneg %p151
      $region22: #{tpu_custom_call.1} parent=5 // pred_check_branch
        %154 = sbr.rel (%p152) target = $region24
      $region23: #{tpu_custom_call.1} parent=5 // pred_region
        // Predicated region
        $region25: #{tpu_custom_call.1} parent=23 // pred_check
          %p155 = pneg %p36
        $region26: #{tpu_custom_call.1} parent=23 // pred_check_branch
          %157 = sbr.rel (%p155) target = $region28
        $region27: #{tpu_custom_call.1} parent=23 // pred_region
          %s158 = sand.u32 %s26, 1
          %s159 = scalar_lea.sflag [#allocation3], %s158
          %s160 = sand.u32 %s26, 1
          %s161 = smul.addr %s160, 256
          %s162 = scalar_lea.vmem [#allocation2], %s161
          %s163 = smul.u32 32, %s16
          %165 = vsyncadd %s159, 0
          %s166 = smul.addr %s163, 8
          %s167 = scalar_lea.hbm %s0, %s166
          %s168 = sshll.u32 %s167, 4
          %s169 = int_to_ptr.hbm [resolvable:$true] %s168
          %s170 = sshll.u32 %s162, 4
          %s171 = int_to_ptr.vmem [resolvable:$true] %s170
          %176 = dma.hbm_to_vmem [thread:$0]  %s169, 4096, %s171, %s159, 128, 128, 8
        $region28: #{tpu_custom_call.1} parent=23 // pred_fallthru
          _
      $region24: #{tpu_custom_call.1} parent=5 // pred_fallthru
        _
      %p177 = scmp.le.s32.totalorder 1, %s16
      %p178 = scmp.lt.s32.totalorder %s16, 3
      %p179 = pnand %p177, %p178
      %p180 = pneg %p179
      // Predicated region
      $region29: #{tpu_custom_call.1} parent=5 // pred_check
        _
      $region30: #{tpu_custom_call.1} parent=5 // pred_check_branch
        %182 = sbr.rel (%p179) target = $region32
      $region31: #{tpu_custom_call.1} parent=5 // pred_region
        %s183 = ssub.s32 %s16, 1
        %s184 = sand.u32 %s29, 1
        %s185 = scalar_lea.sflag [#allocation3], %s184
        %s186 = sand.u32 %s29, 1
        %s187 = smul.addr %s186, 256
        %s188 = scalar_lea.vmem [#allocation2], %s187
        // Predicated region
        $region33: #{tpu_custom_call.1} parent=31 // pred_check
          %p189 = pneg %p42
        $region34: #{tpu_custom_call.1} parent=31 // pred_check_branch
          %191 = sbr.rel (%p189) target = $region36
        $region35: #{tpu_custom_call.1} parent=31 // pred_region
          %193 = dma.done %s185, 4096
        $region36: #{tpu_custom_call.1} parent=31 // pred_fallthru
          _
        // Predicated region
        $region37: #{tpu_custom_call.1} parent=31 // pred_check
          %p194 = pneg %p63
        $region38: #{tpu_custom_call.1} parent=31 // pred_check_branch
          %196 = sbr.rel (%p194) target = $region40
        $region39: #{tpu_custom_call.1} parent=31 // pred_region
          %198 = dma.done [#allocation6], 6144
        $region40: #{tpu_custom_call.1} parent=31 // pred_fallthru
          _
        // Predicated region
        $region41: #{tpu_custom_call.1} parent=31 // pred_check
          %p199 = pneg %p84
        $region42: #{tpu_custom_call.1} parent=31 // pred_check_branch
          %201 = sbr.rel (%p199) target = $region44
        $region43: #{tpu_custom_call.1} parent=31 // pred_region
          %203 = dma.done [#allocation6], 128
        $region44: #{tpu_custom_call.1} parent=31 // pred_fallthru
          _
        %s204 = sand.u32 %s29, 1
        %s205 = scalar_lea.sflag [#allocation3], %s204
        %s206 = sand.u32 %s29, 1
        %s207 = smul.addr %s206, 256
        %s208 = scalar_lea.vmem [#allocation2], %s207
        %p209 = pneg %p42
        %p210 = pneg %p39
        %p211 = pneg %p63
        %p212 = pneg %p60
        %p213 = pneg %p84
        %p214 = pneg %p81
        %p215 = pneg %p110
        %p216 = pneg %p107
        %s217 = sand.u32 %s97, 1
        %s218 = scalar_lea.sflag [#allocation4], %s217
        %s219 = sand.u32 %s97, 1
        %s220 = smul.addr %s219, 256
        %s221 = scalar_lea.vmem [#allocation8], %s220
        %s222 = smul.u32 32, %s21
        %s223 = smul.u32 32, %s21
        %v224 = vld [vmem:[%s188] sm:$0xff]
        %v225 = vld [vmem:[%s188 + $0x8] sm:$0xff]
        %v226 = vld [vmem:[%s188 + $0x10] sm:$0xff]
        %v227 = vld [vmem:[%s188 + $0x18] sm:$0xff]
        %v228 = vld [vmem:[%s188 + $0x20] sm:$0xff]
        %v229 = vld [vmem:[%s188 + $0x28] sm:$0xff]
        %v230 = vld [vmem:[%s188 + $0x30] sm:$0xff]
        %v231 = vld [vmem:[%s188 + $0x38] sm:$0xff]
        %v232 = vld [vmem:[%s188 + $0x40] sm:$0xff]
        %v233 = vld [vmem:[%s188 + $0x48] sm:$0xff]
        %v234 = vld [vmem:[%s188 + $0x50] sm:$0xff]
        %v235 = vld [vmem:[%s188 + $0x58] sm:$0xff]
        %v236 = vld [vmem:[%s188 + $0x60] sm:$0xff]
        %v237 = vld [vmem:[%s188 + $0x68] sm:$0xff]
        %v238 = vld [vmem:[%s188 + $0x70] sm:$0xff]
        %v239 = vld [vmem:[%s188 + $0x78] sm:$0xff]
        %v240 = vld [vmem:[%s188 + $0x80] sm:$0xff]
        %v241 = vld [vmem:[%s188 + $0x88] sm:$0xff]
        %v242 = vld [vmem:[%s188 + $0x90] sm:$0xff]
        %v243 = vld [vmem:[%s188 + $0x98] sm:$0xff]
        %v244 = vld [vmem:[%s188 + $0xa0] sm:$0xff]
        %v245 = vld [vmem:[%s188 + $0xa8] sm:$0xff]
        %v246 = vld [vmem:[%s188 + $0xb0] sm:$0xff]
        %v247 = vld [vmem:[%s188 + $0xb8] sm:$0xff]
        %v248 = vld [vmem:[%s188 + $0xc0] sm:$0xff]
        %v249 = vld [vmem:[%s188 + $0xc8] sm:$0xff]
        %v250 = vld [vmem:[%s188 + $0xd0] sm:$0xff]
        %v251 = vld [vmem:[%s188 + $0xd8] sm:$0xff]
        %v252 = vld [vmem:[%s188 + $0xe0] sm:$0xff]
        %v253 = vld [vmem:[%s188 + $0xe8] sm:$0xff]
        %v254 = vld [vmem:[%s188 + $0xf0] sm:$0xff]
        %v255 = vld [vmem:[%s188 + $0xf8] sm:$0xff]
        %v256 = vld [vmem:[#allocation5] sm:$0xff]
        %v257 = vld [vmem:[#allocation5 + $0x8] sm:$0xff]
        %v258 = vld [vmem:[#allocation5 + $0x10] sm:$0xff]
        %v259 = vld [vmem:[#allocation5 + $0x18] sm:$0xff]
        %v260 = vld [vmem:[#allocation5 + $0x20] sm:$0xff]
        %v261 = vld [vmem:[#allocation5 + $0x28] sm:$0xff]
        %v262 = vld [vmem:[#allocation5 + $0x30] sm:$0xff]
        %v263 = vld [vmem:[#allocation5 + $0x38] sm:$0xff]
        %v264 = vld [vmem:[#allocation5 + $0x40] sm:$0xff]
        %v265 = vld [vmem:[#allocation5 + $0x48] sm:$0xff]
        %v266 = vld [vmem:[#allocation5 + $0x50] sm:$0xff]
        %v267 = vld [vmem:[#allocation5 + $0x58] sm:$0xff]
        %v268 = vld [vmem:[#allocation5 + $0x60] sm:$0xff]
        %v269 = vld [vmem:[#allocation5 + $0x68] sm:$0xff]
        %v270 = vld [vmem:[#allocation5 + $0x70] sm:$0xff]
        %v271 = vld [vmem:[#allocation5 + $0x78] sm:$0xff]
        %v272 = vld [vmem:[#allocation5 + $0x80] sm:$0xff]
        %v273 = vld [vmem:[#allocation5 + $0x88] sm:$0xff]
        %v274 = vld [vmem:[#allocation5 + $0x90] sm:$0xff]
        %v275 = vld [vmem:[#allocation5 + $0x98] sm:$0xff]
        %v276 = vld [vmem:[#allocation5 + $0xa0] sm:$0xff]
        %v277 = vld [vmem:[#allocation5 + $0xa8] sm:$0xff]
        %v278 = vld [vmem:[#allocation5 + $0xb0] sm:$0xff]
        %v279 = vld [vmem:[#allocation5 + $0xb8] sm:$0xff]
        %v280 = vld [vmem:[#allocation5 + $0xc0] sm:$0xff]
        %v281 = vld [vmem:[#allocation5 + $0xc8] sm:$0xff]
        %v282 = vld [vmem:[#allocation5 + $0xd0] sm:$0xff]
        %v283 = vld [vmem:[#allocation5 + $0xd8] sm:$0xff]
        %v284 = vld [vmem:[#allocation5 + $0xe0] sm:$0xff]
        %v285 = vld [vmem:[#allocation5 + $0xe8] sm:$0xff]
        %v286 = vld [vmem:[#allocation5 + $0xf0] sm:$0xff]
        %v287 = vld [vmem:[#allocation5 + $0xf8] sm:$0xff]
        %v288 = vld [vmem:[#allocation5 + $0x100] sm:$0xff]
        %v289 = vld [vmem:[#allocation5 + $0x108] sm:$0xff]
        %v290 = vld [vmem:[#allocation5 + $0x110] sm:$0xff]
        %v291 = vld [vmem:[#allocation5 + $0x118] sm:$0xff]
        %v292 = vld [vmem:[#allocation5 + $0x120] sm:$0xff]
        %v293 = vld [vmem:[#allocation5 + $0x128] sm:$0xff]
        %v294 = vld [vmem:[#allocation5 + $0x130] sm:$0xff]
        %v295 = vld [vmem:[#allocation5 + $0x138] sm:$0xff]
        %v296 = vld [vmem:[#allocation5 + $0x140] sm:$0xff]
        %v297 = vld [vmem:[#allocation5 + $0x148] sm:$0xff]
        %v298 = vld [vmem:[#allocation5 + $0x150] sm:$0xff]
        %v299 = vld [vmem:[#allocation5 + $0x158] sm:$0xff]
        %v300 = vld [vmem:[#allocation5 + $0x160] sm:$0xff]
        %v301 = vld [vmem:[#allocation5 + $0x168] sm:$0xff]
        %v302 = vld [vmem:[#allocation5 + $0x170] sm:$0xff]
        %v303 = vld [vmem:[#allocation5 + $0x178] sm:$0xff]
        %v304 = vld [vmem:[#allocation7] sm:$0x1]
        %v305 = vld [vmem:[#allocation7 + $0x1] sm:$0x1]
        %v306 = vld [vmem:[#allocation7 + $0x2] sm:$0x1]
        %v307 = vperm.slane %v304, 0
        %308 = vmatpush.msra.mxu0 %v271
        %309 = vmatpush.msra.mxu0 %v270
        %310 = vmatpush.msra.mxu0 %v269
        %311 = vmatpush.msra.mxu0 %v268
        %312 = vmatpush.msra.mxu0 %v267
        %313 = vmatpush.msra.mxu0 %v266
        %314 = vmatpush.msra.mxu0 %v265
        %315 = vmatpush.msra.mxu0 %v264
        %316 = vmatpush.msra.mxu0 %v263
        %317 = vmatpush.msra.mxu0 %v262
        %318 = vmatpush.msra.mxu0 %v261
        %319 = vmatpush.msra.mxu0 %v260
        %320 = vmatpush.msra.mxu0 %v259
        %321 = vmatpush.msra.mxu0 %v258
        %322 = vmatpush.msra.mxu0 %v257
        %323 = vmatpush.msra.mxu0 %v256
        %324 = vmatmul.f32.gmra.mxu0 %v224
        %v325 = vpop.f32.mrf.mxu0
        %v326 = vadd.f32 %v307, %v325
        %327 = vmatmul.f32.gmra.mxu0 %v225
        %v328 = vpop.f32.mrf.mxu0
        %v329 = vadd.f32 %v307, %v328
        %330 = vmatmul.f32.gmra.mxu0 %v226
        %v331 = vpop.f32.mrf.mxu0
        %v332 = vadd.f32 %v307, %v331
        %333 = vmatmul.f32.gmra.mxu0 %v227
        %v334 = vpop.f32.mrf.mxu0
        %v335 = vadd.f32 %v307, %v334
        %336 = vmatmul.f32.gmra.mxu0 %v228
        %v337 = vpop.f32.mrf.mxu0
        %v338 = vadd.f32 %v307, %v337
        %339 = vmatmul.f32.gmra.mxu0 %v229
        %v340 = vpop.f32.mrf.mxu0
        %v341 = vadd.f32 %v307, %v340
        %342 = vmatmul.f32.gmra.mxu0 %v230
        %v343 = vpop.f32.mrf.mxu0
        %v344 = vadd.f32 %v307, %v343
        %345 = vmatmul.f32.gmra.mxu0 %v231
        %v346 = vpop.f32.mrf.mxu0
        %v347 = vadd.f32 %v307, %v346
        %348 = vmatmul.f32.gmra.mxu0 %v232
        %v349 = vpop.f32.mrf.mxu0
        %v350 = vadd.f32 %v307, %v349
        %351 = vmatmul.f32.gmra.mxu0 %v233
        %v352 = vpop.f32.mrf.mxu0
        %v353 = vadd.f32 %v307, %v352
        %354 = vmatmul.f32.gmra.mxu0 %v234
        %v355 = vpop.f32.mrf.mxu0
        %v356 = vadd.f32 %v307, %v355
        %357 = vmatmul.f32.gmra.mxu0 %v235
        %v358 = vpop.f32.mrf.mxu0
        %v359 = vadd.f32 %v307, %v358
        %360 = vmatmul.f32.gmra.mxu0 %v236
        %v361 = vpop.f32.mrf.mxu0
        %v362 = vadd.f32 %v307, %v361
        %363 = vmatmul.f32.gmra.mxu0 %v237
        %v364 = vpop.f32.mrf.mxu0
        %v365 = vadd.f32 %v307, %v364
        %366 = vmatmul.f32.gmra.mxu0 %v238
        %v367 = vpop.f32.mrf.mxu0
        %v368 = vadd.f32 %v307, %v367
        %369 = vmatmul.f32.gmra.mxu0 %v239
        %v370 = vpop.f32.mrf.mxu0
        %v371 = vadd.f32 %v307, %v370
        %372 = vmatmul.f32.gmra.mxu0 %v240
        %v373 = vpop.f32.mrf.mxu0
        %v374 = vadd.f32 %v307, %v373
        %375 = vmatmul.f32.gmra.mxu0 %v241
        %v376 = vpop.f32.mrf.mxu0
        %v377 = vadd.f32 %v307, %v376
        %378 = vmatmul.f32.gmra.mxu0 %v242
        %v379 = vpop.f32.mrf.mxu0
        %v380 = vadd.f32 %v307, %v379
        %381 = vmatmul.f32.gmra.mxu0 %v243
        %v382 = vpop.f32.mrf.mxu0
        %v383 = vadd.f32 %v307, %v382
        %384 = vmatmul.f32.gmra.mxu0 %v244
        %v385 = vpop.f32.mrf.mxu0
        %v386 = vadd.f32 %v307, %v385
        %387 = vmatmul.f32.gmra.mxu0 %v245
        %v388 = vpop.f32.mrf.mxu0
        %v389 = vadd.f32 %v307, %v388
        %390 = vmatmul.f32.gmra.mxu0 %v246
        %v391 = vpop.f32.mrf.mxu0
        %v392 = vadd.f32 %v307, %v391
        %393 = vmatmul.f32.gmra.mxu0 %v247
        %v394 = vpop.f32.mrf.mxu0
        %v395 = vadd.f32 %v307, %v394
        %396 = vmatmul.f32.gmra.mxu0 %v248
        %v397 = vpop.f32.mrf.mxu0
        %v398 = vadd.f32 %v307, %v397
        %399 = vmatmul.f32.gmra.mxu0 %v249
        %v400 = vpop.f32.mrf.mxu0
        %v401 = vadd.f32 %v307, %v400
        %402 = vmatmul.f32.gmra.mxu0 %v250
        %v403 = vpop.f32.mrf.mxu0
        %v404 = vadd.f32 %v307, %v403
        %405 = vmatmul.f32.gmra.mxu0 %v251
        %v406 = vpop.f32.mrf.mxu0
        %v407 = vadd.f32 %v307, %v406
        %408 = vmatmul.f32.gmra.mxu0 %v252
        %v409 = vpop.f32.mrf.mxu0
        %v410 = vadd.f32 %v307, %v409
        %411 = vmatmul.f32.gmra.mxu0 %v253
        %v412 = vpop.f32.mrf.mxu0
        %v413 = vadd.f32 %v307, %v412
        %414 = vmatmul.f32.gmra.mxu0 %v254
        %v415 = vpop.f32.mrf.mxu0
        %v416 = vadd.f32 %v307, %v415
        %417 = vmatmul.f32.gmra.mxu0 %v255
        %v418 = vpop.f32.mrf.mxu0
        %v419 = vadd.f32 %v307, %v418
        %420 = vdwg.mxu0
        %v421 = vmax.f32 %v326, 0.0
        %v422 = vmax.f32 %v329, 0.0
        %v423 = vmax.f32 %v332, 0.0
        %v424 = vmax.f32 %v335, 0.0
        %v425 = vmax.f32 %v338, 0.0
        %v426 = vmax.f32 %v341, 0.0
        %v427 = vmax.f32 %v344, 0.0
        %v428 = vmax.f32 %v347, 0.0
        %v429 = vmax.f32 %v350, 0.0
        %v430 = vmax.f32 %v353, 0.0
        %v431 = vmax.f32 %v356, 0.0
        %v432 = vmax.f32 %v359, 0.0
        %v433 = vmax.f32 %v362, 0.0
        %v434 = vmax.f32 %v365, 0.0
        %v435 = vmax.f32 %v368, 0.0
        %v436 = vmax.f32 %v371, 0.0
        %v437 = vmax.f32 %v374, 0.0
        %v438 = vmax.f32 %v377, 0.0
        %v439 = vmax.f32 %v380, 0.0
        %v440 = vmax.f32 %v383, 0.0
        %v441 = vmax.f32 %v386, 0.0
        %v442 = vmax.f32 %v389, 0.0
        %v443 = vmax.f32 %v392, 0.0
        %v444 = vmax.f32 %v395, 0.0
        %v445 = vmax.f32 %v398, 0.0
        %v446 = vmax.f32 %v401, 0.0
        %v447 = vmax.f32 %v404, 0.0
        %v448 = vmax.f32 %v407, 0.0
        %v449 = vmax.f32 %v410, 0.0
        %v450 = vmax.f32 %v413, 0.0
        %v451 = vmax.f32 %v416, 0.0
        %v452 = vmax.f32 %v419, 0.0
        %v453 = vperm.slane %v305, 0
        %454 = vmatpush.msra.mxu0 %v287
        %455 = vmatpush.msra.mxu0 %v286
        %456 = vmatpush.msra.mxu0 %v285
        %457 = vmatpush.msra.mxu0 %v284
        %458 = vmatpush.msra.mxu0 %v283
        %459 = vmatpush.msra.mxu0 %v282
        %460 = vmatpush.msra.mxu0 %v281
        %461 = vmatpush.msra.mxu0 %v280
        %462 = vmatpush.msra.mxu0 %v279
        %463 = vmatpush.msra.mxu0 %v278
        %464 = vmatpush.msra.mxu0 %v277
        %465 = vmatpush.msra.mxu0 %v276
        %466 = vmatpush.msra.mxu0 %v275
        %467 = vmatpush.msra.mxu0 %v274
        %468 = vmatpush.msra.mxu0 %v273
        %469 = vmatpush.msra.mxu0 %v272
        %470 = vmatmul.f32.gmra.mxu0 %v421
        %v471 = vpop.f32.mrf.mxu0
        %v472 = vadd.f32 %v453, %v471
        %473 = vmatmul.f32.gmra.mxu0 %v422
        %v474 = vpop.f32.mrf.mxu0
        %v475 = vadd.f32 %v453, %v474
        %476 = vmatmul.f32.gmra.mxu0 %v423
        %v477 = vpop.f32.mrf.mxu0
        %v478 = vadd.f32 %v453, %v477
        %479 = vmatmul.f32.gmra.mxu0 %v424
        %v480 = vpop.f32.mrf.mxu0
        %v481 = vadd.f32 %v453, %v480
        %482 = vmatmul.f32.gmra.mxu0 %v425
        %v483 = vpop.f32.mrf.mxu0
        %v484 = vadd.f32 %v453, %v483
        %485 = vmatmul.f32.gmra.mxu0 %v426
        %v486 = vpop.f32.mrf.mxu0
        %v487 = vadd.f32 %v453, %v486
        %488 = vmatmul.f32.gmra.mxu0 %v427
        %v489 = vpop.f32.mrf.mxu0
        %v490 = vadd.f32 %v453, %v489
        %491 = vmatmul.f32.gmra.mxu0 %v428
        %v492 = vpop.f32.mrf.mxu0
        %v493 = vadd.f32 %v453, %v492
        %494 = vmatmul.f32.gmra.mxu0 %v429
        %v495 = vpop.f32.mrf.mxu0
        %v496 = vadd.f32 %v453, %v495
        %497 = vmatmul.f32.gmra.mxu0 %v430
        %v498 = vpop.f32.mrf.mxu0
        %v499 = vadd.f32 %v453, %v498
        %500 = vmatmul.f32.gmra.mxu0 %v431
        %v501 = vpop.f32.mrf.mxu0
        %v502 = vadd.f32 %v453, %v501
        %503 = vmatmul.f32.gmra.mxu0 %v432
        %v504 = vpop.f32.mrf.mxu0
        %v505 = vadd.f32 %v453, %v504
        %506 = vmatmul.f32.gmra.mxu0 %v433
        %v507 = vpop.f32.mrf.mxu0
        %v508 = vadd.f32 %v453, %v507
        %509 = vmatmul.f32.gmra.mxu0 %v434
        %v510 = vpop.f32.mrf.mxu0
        %v511 = vadd.f32 %v453, %v510
        %512 = vmatmul.f32.gmra.mxu0 %v435
        %v513 = vpop.f32.mrf.mxu0
        %v514 = vadd.f32 %v453, %v513
        %515 = vmatmul.f32.gmra.mxu0 %v436
        %v516 = vpop.f32.mrf.mxu0
        %v517 = vadd.f32 %v453, %v516
        %518 = vmatmul.f32.gmra.mxu0 %v437
        %v519 = vpop.f32.mrf.mxu0
        %v520 = vadd.f32 %v453, %v519
        %521 = vmatmul.f32.gmra.mxu0 %v438
        %v522 = vpop.f32.mrf.mxu0
        %v523 = vadd.f32 %v453, %v522
        %524 = vmatmul.f32.gmra.mxu0 %v439
        %v525 = vpop.f32.mrf.mxu0
        %v526 = vadd.f32 %v453, %v525
        %527 = vmatmul.f32.gmra.mxu0 %v440
        %v528 = vpop.f32.mrf.mxu0
        %v529 = vadd.f32 %v453, %v528
        %530 = vmatmul.f32.gmra.mxu0 %v441
        %v531 = vpop.f32.mrf.mxu0
        %v532 = vadd.f32 %v453, %v531
        %533 = vmatmul.f32.gmra.mxu0 %v442
        %v534 = vpop.f32.mrf.mxu0
        %v535 = vadd.f32 %v453, %v534
        %536 = vmatmul.f32.gmra.mxu0 %v443
        %v537 = vpop.f32.mrf.mxu0
        %v538 = vadd.f32 %v453, %v537
        %539 = vmatmul.f32.gmra.mxu0 %v444
        %v540 = vpop.f32.mrf.mxu0
        %v541 = vadd.f32 %v453, %v540
        %542 = vmatmul.f32.gmra.mxu0 %v445
        %v543 = vpop.f32.mrf.mxu0
        %v544 = vadd.f32 %v453, %v543
        %545 = vmatmul.f32.gmra.mxu0 %v446
        %v546 = vpop.f32.mrf.mxu0
        %v547 = vadd.f32 %v453, %v546
        %548 = vmatmul.f32.gmra.mxu0 %v447
        %v549 = vpop.f32.mrf.mxu0
        %v550 = vadd.f32 %v453, %v549
        %551 = vmatmul.f32.gmra.mxu0 %v448
        %v552 = vpop.f32.mrf.mxu0
        %v553 = vadd.f32 %v453, %v552
        %554 = vmatmul.f32.gmra.mxu0 %v449
        %v555 = vpop.f32.mrf.mxu0
        %v556 = vadd.f32 %v453, %v555
        %557 = vmatmul.f32.gmra.mxu0 %v450
        %v558 = vpop.f32.mrf.mxu0
        %v559 = vadd.f32 %v453, %v558
        %560 = vmatmul.f32.gmra.mxu0 %v451
        %v561 = vpop.f32.mrf.mxu0
        %v562 = vadd.f32 %v453, %v561
        %563 = vmatmul.f32.gmra.mxu0 %v452
        %v564 = vpop.f32.mrf.mxu0
        %v565 = vadd.f32 %v453, %v564
        %566 = vdwg.mxu0
        %v567 = vmax.f32 %v472, 0.0
        %v568 = vmax.f32 %v475, 0.0
        %v569 = vmax.f32 %v478, 0.0
        %v570 = vmax.f32 %v481, 0.0
        %v571 = vmax.f32 %v484, 0.0
        %v572 = vmax.f32 %v487, 0.0
        %v573 = vmax.f32 %v490, 0.0
        %v574 = vmax.f32 %v493, 0.0
        %v575 = vmax.f32 %v496, 0.0
        %v576 = vmax.f32 %v499, 0.0
        %v577 = vmax.f32 %v502, 0.0
        %v578 = vmax.f32 %v505, 0.0
        %v579 = vmax.f32 %v508, 0.0
        %v580 = vmax.f32 %v511, 0.0
        %v581 = vmax.f32 %v514, 0.0
        %v582 = vmax.f32 %v517, 0.0
        %v583 = vmax.f32 %v520, 0.0
        %v584 = vmax.f32 %v523, 0.0
        %v585 = vmax.f32 %v526, 0.0
        %v586 = vmax.f32 %v529, 0.0
        %v587 = vmax.f32 %v532, 0.0
        %v588 = vmax.f32 %v535, 0.0
        %v589 = vmax.f32 %v538, 0.0
        %v590 = vmax.f32 %v541, 0.0
        %v591 = vmax.f32 %v544, 0.0
        %v592 = vmax.f32 %v547, 0.0
        %v593 = vmax.f32 %v550, 0.0
        %v594 = vmax.f32 %v553, 0.0
        %v595 = vmax.f32 %v556, 0.0
        %v596 = vmax.f32 %v559, 0.0
        %v597 = vmax.f32 %v562, 0.0
        %v598 = vmax.f32 %v565, 0.0
        %v599 = vperm.slane %v306, 0
        %600 = vmatpush.msra.mxu0 %v303
        %601 = vmatpush.msra.mxu0 %v302
        %602 = vmatpush.msra.mxu0 %v301
        %603 = vmatpush.msra.mxu0 %v300
        %604 = vmatpush.msra.mxu0 %v299
        %605 = vmatpush.msra.mxu0 %v298
        %606 = vmatpush.msra.mxu0 %v297
        %607 = vmatpush.msra.mxu0 %v296
        %608 = vmatpush.msra.mxu0 %v295
        %609 = vmatpush.msra.mxu0 %v294
        %610 = vmatpush.msra.mxu0 %v293
        %611 = vmatpush.msra.mxu0 %v292
        %612 = vmatpush.msra.mxu0 %v291
        %613 = vmatpush.msra.mxu0 %v290
        %614 = vmatpush.msra.mxu0 %v289
        %615 = vmatpush.msra.mxu0 %v288
        %616 = vmatmul.f32.gmra.mxu0 %v567
        %v617 = vpop.f32.mrf.mxu0
        %v618 = vadd.f32 %v599, %v617
        %619 = vmatmul.f32.gmra.mxu0 %v568
        %v620 = vpop.f32.mrf.mxu0
        %v621 = vadd.f32 %v599, %v620
        %622 = vmatmul.f32.gmra.mxu0 %v569
        %v623 = vpop.f32.mrf.mxu0
        %v624 = vadd.f32 %v599, %v623
        %625 = vmatmul.f32.gmra.mxu0 %v570
        %v626 = vpop.f32.mrf.mxu0
        %v627 = vadd.f32 %v599, %v626
        %628 = vmatmul.f32.gmra.mxu0 %v571
        %v629 = vpop.f32.mrf.mxu0
        %v630 = vadd.f32 %v599, %v629
        %631 = vmatmul.f32.gmra.mxu0 %v572
        %v632 = vpop.f32.mrf.mxu0
        %v633 = vadd.f32 %v599, %v632
        %634 = vmatmul.f32.gmra.mxu0 %v573
        %v635 = vpop.f32.mrf.mxu0
        %v636 = vadd.f32 %v599, %v635
        %637 = vmatmul.f32.gmra.mxu0 %v574
        %v638 = vpop.f32.mrf.mxu0
        %v639 = vadd.f32 %v599, %v638
        %640 = vmatmul.f32.gmra.mxu0 %v575
        %v641 = vpop.f32.mrf.mxu0
        %v642 = vadd.f32 %v599, %v641
        %643 = vmatmul.f32.gmra.mxu0 %v576
        %v644 = vpop.f32.mrf.mxu0
        %v645 = vadd.f32 %v599, %v644
        %646 = vmatmul.f32.gmra.mxu0 %v577
        %v647 = vpop.f32.mrf.mxu0
        %v648 = vadd.f32 %v599, %v647
        %649 = vmatmul.f32.gmra.mxu0 %v578
        %v650 = vpop.f32.mrf.mxu0
        %v651 = vadd.f32 %v599, %v650
        %652 = vmatmul.f32.gmra.mxu0 %v579
        %v653 = vpop.f32.mrf.mxu0
        %v654 = vadd.f32 %v599, %v653
        %655 = vmatmul.f32.gmra.mxu0 %v580
        %v656 = vpop.f32.mrf.mxu0
        %v657 = vadd.f32 %v599, %v656
        %658 = vmatmul.f32.gmra.mxu0 %v581
        %v659 = vpop.f32.mrf.mxu0
        %v660 = vadd.f32 %v599, %v659
        %661 = vmatmul.f32.gmra.mxu0 %v582
        %v662 = vpop.f32.mrf.mxu0
        %v663 = vadd.f32 %v599, %v662
        %664 = vmatmul.f32.gmra.mxu0 %v583
        %v665 = vpop.f32.mrf.mxu0
        %v666 = vadd.f32 %v599, %v665
        %667 = vmatmul.f32.gmra.mxu0 %v584
        %v668 = vpop.f32.mrf.mxu0
        %v669 = vadd.f32 %v599, %v668
        %670 = vmatmul.f32.gmra.mxu0 %v585
        %v671 = vpop.f32.mrf.mxu0
        %v672 = vadd.f32 %v599, %v671
        %673 = vmatmul.f32.gmra.mxu0 %v586
        %v674 = vpop.f32.mrf.mxu0
        %v675 = vadd.f32 %v599, %v674
        %676 = vmatmul.f32.gmra.mxu0 %v587
        %v677 = vpop.f32.mrf.mxu0
        %v678 = vadd.f32 %v599, %v677
        %679 = vmatmul.f32.gmra.mxu0 %v588
        %v680 = vpop.f32.mrf.mxu0
        %v681 = vadd.f32 %v599, %v680
        %682 = vmatmul.f32.gmra.mxu0 %v589
        %v683 = vpop.f32.mrf.mxu0
        %v684 = vadd.f32 %v599, %v683
        %685 = vmatmul.f32.gmra.mxu0 %v590
        %v686 = vpop.f32.mrf.mxu0
        %v687 = vadd.f32 %v599, %v686
        %688 = vmatmul.f32.gmra.mxu0 %v591
        %v689 = vpop.f32.mrf.mxu0
        %v690 = vadd.f32 %v599, %v689
        %691 = vmatmul.f32.gmra.mxu0 %v592
        %v692 = vpop.f32.mrf.mxu0
        %v693 = vadd.f32 %v599, %v692
        %694 = vmatmul.f32.gmra.mxu0 %v593
        %v695 = vpop.f32.mrf.mxu0
        %v696 = vadd.f32 %v599, %v695
        %697 = vmatmul.f32.gmra.mxu0 %v594
        %v698 = vpop.f32.mrf.mxu0
        %v699 = vadd.f32 %v599, %v698
        %700 = vmatmul.f32.gmra.mxu0 %v595
        %v701 = vpop.f32.mrf.mxu0
        %v702 = vadd.f32 %v599, %v701
        %703 = vmatmul.f32.gmra.mxu0 %v596
        %v704 = vpop.f32.mrf.mxu0
        %v705 = vadd.f32 %v599, %v704
        %706 = vmatmul.f32.gmra.mxu0 %v597
        %v707 = vpop.f32.mrf.mxu0
        %v708 = vadd.f32 %v599, %v707
        %709 = vmatmul.f32.gmra.mxu0 %v598
        %v710 = vpop.f32.mrf.mxu0
        %v711 = vadd.f32 %v599, %v710
        %712 = vdwg.mxu0
        %v713 = vlaneseq
        %v714 = vand.u32 %v713, 127
        %vm715 = vcmp.ge.s32.totalorder %v714, 16
        %vm716 = vcmp.lt.s32.totalorder %v714, 24
        %vm717 = vmand %vm715, %vm716
        %vm718 = vcmp.lt.s32.totalorder %v714, 8
        %vm719 = vcmp.gt.f32.partialorder %v618, 20.0
        %vm720 = vcmp.gt.f32.partialorder %v621, 20.0
        %vm721 = vcmp.gt.f32.partialorder %v624, 20.0
        %vm722 = vcmp.gt.f32.partialorder %v627, 20.0
        %vm723 = vcmp.gt.f32.partialorder %v630, 20.0
        %vm724 = vcmp.gt.f32.partialorder %v633, 20.0
        %vm725 = vcmp.gt.f32.partialorder %v636, 20.0
        %vm726 = vcmp.gt.f32.partialorder %v639, 20.0
        %vm727 = vcmp.gt.f32.partialorder %v642, 20.0
        %vm728 = vcmp.gt.f32.partialorder %v645, 20.0
        %vm729 = vcmp.gt.f32.partialorder %v648, 20.0
        %vm730 = vcmp.gt.f32.partialorder %v651, 20.0
        %vm731 = vcmp.gt.f32.partialorder %v654, 20.0
        %vm732 = vcmp.gt.f32.partialorder %v657, 20.0
        %vm733 = vcmp.gt.f32.partialorder %v660, 20.0
        %vm734 = vcmp.gt.f32.partialorder %v663, 20.0
        %vm735 = vcmp.gt.f32.partialorder %v666, 20.0
        %vm736 = vcmp.gt.f32.partialorder %v669, 20.0
        %vm737 = vcmp.gt.f32.partialorder %v672, 20.0
        %vm738 = vcmp.gt.f32.partialorder %v675, 20.0
        %vm739 = vcmp.gt.f32.partialorder %v678, 20.0
        %vm740 = vcmp.gt.f32.partialorder %v681, 20.0
        %vm741 = vcmp.gt.f32.partialorder %v684, 20.0
        %vm742 = vcmp.gt.f32.partialorder %v687, 20.0
        %vm743 = vcmp.gt.f32.partialorder %v690, 20.0
        %vm744 = vcmp.gt.f32.partialorder %v693, 20.0
        %vm745 = vcmp.gt.f32.partialorder %v696, 20.0
        %vm746 = vcmp.gt.f32.partialorder %v699, 20.0
        %vm747 = vcmp.gt.f32.partialorder %v702, 20.0
        %vm748 = vcmp.gt.f32.partialorder %v705, 20.0
        %vm749 = vcmp.gt.f32.partialorder %v708, 20.0
        %vm750 = vcmp.gt.f32.partialorder %v711, 20.0
        %v751 = vmin.f32 %v618, 20.0
        %v752 = vmin.f32 %v621, 20.0
        %v753 = vmin.f32 %v624, 20.0
        %v754 = vmin.f32 %v627, 20.0
        %v755 = vmin.f32 %v630, 20.0
        %v756 = vmin.f32 %v633, 20.0
        %v757 = vmin.f32 %v636, 20.0
        %v758 = vmin.f32 %v639, 20.0
        %v759 = vmin.f32 %v642, 20.0
        %v760 = vmin.f32 %v645, 20.0
        %v761 = vmin.f32 %v648, 20.0
        %v762 = vmin.f32 %v651, 20.0
        %v763 = vmin.f32 %v654, 20.0
        %v764 = vmin.f32 %v657, 20.0
        %v765 = vmin.f32 %v660, 20.0
        %v766 = vmin.f32 %v663, 20.0
        %v767 = vmin.f32 %v666, 20.0
        %v768 = vmin.f32 %v669, 20.0
        %v769 = vmin.f32 %v672, 20.0
        %v770 = vmin.f32 %v675, 20.0
        %v771 = vmin.f32 %v678, 20.0
        %v772 = vmin.f32 %v681, 20.0
        %v773 = vmin.f32 %v684, 20.0
        %v774 = vmin.f32 %v687, 20.0
        %v775 = vmin.f32 %v690, 20.0
        %v776 = vmin.f32 %v693, 20.0
        %v777 = vmin.f32 %v696, 20.0
        %v778 = vmin.f32 %v699, 20.0
        %v779 = vmin.f32 %v702, 20.0
        %v780 = vmin.f32 %v705, 20.0
        %v781 = vmin.f32 %v708, 20.0
        %v782 = vmin.f32 %v711, 20.0
        %v783 = vmul.f32 %v751, 1.442695
        %v784 = vpow.pop %v783
        %v785 = vmul.f32 %v752, 1.442695
        %v786 = vpow.pop %v785
        %v787 = vmul.f32 %v753, 1.442695
        %v788 = vpow.pop %v787
        %v789 = vmul.f32 %v754, 1.442695
        %v790 = vpow.pop %v789
        %v791 = vmul.f32 %v755, 1.442695
        %v792 = vpow.pop %v791
        %v793 = vmul.f32 %v756, 1.442695
        %v794 = vpow.pop %v793
        %v795 = vmul.f32 %v757, 1.442695
        %v796 = vpow.pop %v795
        %v797 = vmul.f32 %v758, 1.442695
        %v798 = vpow.pop %v797
        %v799 = vmul.f32 %v759, 1.442695
        %v800 = vpow.pop %v799
        %v801 = vmul.f32 %v760, 1.442695
        %v802 = vpow.pop %v801
        %v803 = vmul.f32 %v761, 1.442695
        %v804 = vpow.pop %v803
        %v805 = vmul.f32 %v762, 1.442695
        %v806 = vpow.pop %v805
        %v807 = vmul.f32 %v763, 1.442695
        %v808 = vpow.pop %v807
        %v809 = vmul.f32 %v764, 1.442695
        %v810 = vpow.pop %v809
        %v811 = vmul.f32 %v765, 1.442695
        %v812 = vpow.pop %v811
        %v813 = vmul.f32 %v766, 1.442695
        %v814 = vpow.pop %v813
        %v815 = vmul.f32 %v767, 1.442695
        %v816 = vpow.pop %v815
        %v817 = vmul.f32 %v768, 1.442695
        %v818 = vpow.pop %v817
        %v819 = vmul.f32 %v769, 1.442695
        %v820 = vpow.pop %v819
        %v821 = vmul.f32 %v770, 1.442695
        %v822 = vpow.pop %v821
        %v823 = vmul.f32 %v771, 1.442695
        %v824 = vpow.pop %v823
        %v825 = vmul.f32 %v772, 1.442695
        %v826 = vpow.pop %v825
        %v827 = vmul.f32 %v773, 1.442695
        %v828 = vpow.pop %v827
        %v829 = vmul.f32 %v774, 1.442695
        %v830 = vpow.pop %v829
        %v831 = vmul.f32 %v775, 1.442695
        %v832 = vpow.pop %v831
        %v833 = vmul.f32 %v776, 1.442695
        %v834 = vpow.pop %v833
        %v835 = vmul.f32 %v777, 1.442695
        %v836 = vpow.pop %v835
        %v837 = vmul.f32 %v778, 1.442695
        %v838 = vpow.pop %v837
        %v839 = vmul.f32 %v779, 1.442695
        %v840 = vpow.pop %v839
        %v841 = vmul.f32 %v780, 1.442695
        %v842 = vpow.pop %v841
        %v843 = vmul.f32 %v781, 1.442695
        %v844 = vpow.pop %v843
        %v845 = vmul.f32 %v782, 1.442695
        %v846 = vpow.pop %v845
        %v847 = vadd.f32 %v784, 1.0
        %v848 = vlog2.pop %v847
        %v849 = vmul.f32 %v848, 0.6931472
        %v850 = vmul.f32 -0.5, %v784
        %v851 = vadd.f32 %v850, 1.0
        %v852 = vmul.f32 %v851, %v784
        %v853 = vand.u32 2147483647, %v784
        %vm854 = vcmp.lt.f32.partialorder %v853, 0.0004427343
        %v855 = vsel %vm854, %v852, %v849
        %v856 = vadd.f32 %v786, 1.0
        %v857 = vlog2.pop %v856
        %v858 = vmul.f32 %v857, 0.6931472
        %v859 = vmul.f32 -0.5, %v786
        %v860 = vadd.f32 %v859, 1.0
        %v861 = vmul.f32 %v860, %v786
        %v862 = vand.u32 2147483647, %v786
        %vm863 = vcmp.lt.f32.partialorder %v862, 0.0004427343
        %v864 = vsel %vm863, %v861, %v858
        %v865 = vadd.f32 %v788, 1.0
        %v866 = vlog2.pop %v865
        %v867 = vmul.f32 %v866, 0.6931472
        %v868 = vmul.f32 -0.5, %v788
        %v869 = vadd.f32 %v868, 1.0
        %v870 = vmul.f32 %v869, %v788
        %v871 = vand.u32 2147483647, %v788
        %vm872 = vcmp.lt.f32.partialorder %v871, 0.0004427343
        %v873 = vsel %vm872, %v870, %v867
        %v874 = vadd.f32 %v790, 1.0
        %v875 = vlog2.pop %v874
        %v876 = vmul.f32 %v875, 0.6931472
        %v877 = vmul.f32 -0.5, %v790
        %v878 = vadd.f32 %v877, 1.0
        %v879 = vmul.f32 %v878, %v790
        %v880 = vand.u32 2147483647, %v790
        %vm881 = vcmp.lt.f32.partialorder %v880, 0.0004427343
        %v882 = vsel %vm881, %v879, %v876
        %v883 = vadd.f32 %v792, 1.0
        %v884 = vlog2.pop %v883
        %v885 = vmul.f32 %v884, 0.6931472
        %v886 = vmul.f32 -0.5, %v792
        %v887 = vadd.f32 %v886, 1.0
        %v888 = vmul.f32 %v887, %v792
        %v889 = vand.u32 2147483647, %v792
        %vm890 = vcmp.lt.f32.partialorder %v889, 0.0004427343
        %v891 = vsel %vm890, %v888, %v885
        %v892 = vadd.f32 %v794, 1.0
        %v893 = vlog2.pop %v892
        %v894 = vmul.f32 %v893, 0.6931472
        %v895 = vmul.f32 -0.5, %v794
        %v896 = vadd.f32 %v895, 1.0
        %v897 = vmul.f32 %v896, %v794
        %v898 = vand.u32 2147483647, %v794
        %vm899 = vcmp.lt.f32.partialorder %v898, 0.0004427343
        %v900 = vsel %vm899, %v897, %v894
        %v901 = vadd.f32 %v796, 1.0
        %v902 = vlog2.pop %v901
        %v903 = vmul.f32 %v902, 0.6931472
        %v904 = vmul.f32 -0.5, %v796
        %v905 = vadd.f32 %v904, 1.0
        %v906 = vmul.f32 %v905, %v796
        %v907 = vand.u32 2147483647, %v796
        %vm908 = vcmp.lt.f32.partialorder %v907, 0.0004427343
        %v909 = vsel %vm908, %v906, %v903
        %v910 = vadd.f32 %v798, 1.0
        %v911 = vlog2.pop %v910
        %v912 = vmul.f32 %v911, 0.6931472
        %v913 = vmul.f32 -0.5, %v798
        %v914 = vadd.f32 %v913, 1.0
        %v915 = vmul.f32 %v914, %v798
        %v916 = vand.u32 2147483647, %v798
        %vm917 = vcmp.lt.f32.partialorder %v916, 0.0004427343
        %v918 = vsel %vm917, %v915, %v912
        %v919 = vadd.f32 %v800, 1.0
        %v920 = vlog2.pop %v919
        %v921 = vmul.f32 %v920, 0.6931472
        %v922 = vmul.f32 -0.5, %v800
        %v923 = vadd.f32 %v922, 1.0
        %v924 = vmul.f32 %v923, %v800
        %v925 = vand.u32 2147483647, %v800
        %vm926 = vcmp.lt.f32.partialorder %v925, 0.0004427343
        %v927 = vsel %vm926, %v924, %v921
        %v928 = vadd.f32 %v802, 1.0
        %v929 = vlog2.pop %v928
        %v930 = vmul.f32 %v929, 0.6931472
        %v931 = vmul.f32 -0.5, %v802
        %v932 = vadd.f32 %v931, 1.0
        %v933 = vmul.f32 %v932, %v802
        %v934 = vand.u32 2147483647, %v802
        %vm935 = vcmp.lt.f32.partialorder %v934, 0.0004427343
        %v936 = vsel %vm935, %v933, %v930
        %v937 = vadd.f32 %v804, 1.0
        %v938 = vlog2.pop %v937
        %v939 = vmul.f32 %v938, 0.6931472
        %v940 = vmul.f32 -0.5, %v804
        %v941 = vadd.f32 %v940, 1.0
        %v942 = vmul.f32 %v941, %v804
        %v943 = vand.u32 2147483647, %v804
        %vm944 = vcmp.lt.f32.partialorder %v943, 0.0004427343
        %v945 = vsel %vm944, %v942, %v939
        %v946 = vadd.f32 %v806, 1.0
        %v947 = vlog2.pop %v946
        %v948 = vmul.f32 %v947, 0.6931472
        %v949 = vmul.f32 -0.5, %v806
        %v950 = vadd.f32 %v949, 1.0
        %v951 = vmul.f32 %v950, %v806
        %v952 = vand.u32 2147483647, %v806
        %vm953 = vcmp.lt.f32.partialorder %v952, 0.0004427343
        %v954 = vsel %vm953, %v951, %v948
        %v955 = vadd.f32 %v808, 1.0
        %v956 = vlog2.pop %v955
        %v957 = vmul.f32 %v956, 0.6931472
        %v958 = vmul.f32 -0.5, %v808
        %v959 = vadd.f32 %v958, 1.0
        %v960 = vmul.f32 %v959, %v808
        %v961 = vand.u32 2147483647, %v808
        %vm962 = vcmp.lt.f32.partialorder %v961, 0.0004427343
        %v963 = vsel %vm962, %v960, %v957
        %v964 = vadd.f32 %v810, 1.0
        %v965 = vlog2.pop %v964
        %v966 = vmul.f32 %v965, 0.6931472
        %v967 = vmul.f32 -0.5, %v810
        %v968 = vadd.f32 %v967, 1.0
        %v969 = vmul.f32 %v968, %v810
        %v970 = vand.u32 2147483647, %v810
        %vm971 = vcmp.lt.f32.partialorder %v970, 0.0004427343
        %v972 = vsel %vm971, %v969, %v966
        %v973 = vadd.f32 %v812, 1.0
        %v974 = vlog2.pop %v973
        %v975 = vmul.f32 %v974, 0.6931472
        %v976 = vmul.f32 -0.5, %v812
        %v977 = vadd.f32 %v976, 1.0
        %v978 = vmul.f32 %v977, %v812
        %v979 = vand.u32 2147483647, %v812
        %vm980 = vcmp.lt.f32.partialorder %v979, 0.0004427343
        %v981 = vsel %vm980, %v978, %v975
        %v982 = vadd.f32 %v814, 1.0
        %v983 = vlog2.pop %v982
        %v984 = vmul.f32 %v983, 0.6931472
        %v985 = vmul.f32 -0.5, %v814
        %v986 = vadd.f32 %v985, 1.0
        %v987 = vmul.f32 %v986, %v814
        %v988 = vand.u32 2147483647, %v814
        %vm989 = vcmp.lt.f32.partialorder %v988, 0.0004427343
        %v990 = vsel %vm989, %v987, %v984
        %v991 = vadd.f32 %v816, 1.0
        %v992 = vlog2.pop %v991
        %v993 = vmul.f32 %v992, 0.6931472
        %v994 = vmul.f32 -0.5, %v816
        %v995 = vadd.f32 %v994, 1.0
        %v996 = vmul.f32 %v995, %v816
        %v997 = vand.u32 2147483647, %v816
        %vm998 = vcmp.lt.f32.partialorder %v997, 0.0004427343
        %v999 = vsel %vm998, %v996, %v993
        %v1000 = vadd.f32 %v818, 1.0
        %v1001 = vlog2.pop %v1000
        %v1002 = vmul.f32 %v1001, 0.6931472
        %v1003 = vmul.f32 -0.5, %v818
        %v1004 = vadd.f32 %v1003, 1.0
        %v1005 = vmul.f32 %v1004, %v818
        %v1006 = vand.u32 2147483647, %v818
        %vm1007 = vcmp.lt.f32.partialorder %v1006, 0.0004427343
        %v1008 = vsel %vm1007, %v1005, %v1002
        %v1009 = vadd.f32 %v820, 1.0
        %v1010 = vlog2.pop %v1009
        %v1011 = vmul.f32 %v1010, 0.6931472
        %v1012 = vmul.f32 -0.5, %v820
        %v1013 = vadd.f32 %v1012, 1.0
        %v1014 = vmul.f32 %v1013, %v820
        %v1015 = vand.u32 2147483647, %v820
        %vm1016 = vcmp.lt.f32.partialorder %v1015, 0.0004427343
        %v1017 = vsel %vm1016, %v1014, %v1011
        %v1018 = vadd.f32 %v822, 1.0
        %v1019 = vlog2.pop %v1018
        %v1020 = vmul.f32 %v1019, 0.6931472
        %v1021 = vmul.f32 -0.5, %v822
        %v1022 = vadd.f32 %v1021, 1.0
        %v1023 = vmul.f32 %v1022, %v822
        %v1024 = vand.u32 2147483647, %v822
        %vm1025 = vcmp.lt.f32.partialorder %v1024, 0.0004427343
        %v1026 = vsel %vm1025, %v1023, %v1020
        %v1027 = vadd.f32 %v824, 1.0
        %v1028 = vlog2.pop %v1027
        %v1029 = vmul.f32 %v1028, 0.6931472
        %v1030 = vmul.f32 -0.5, %v824
        %v1031 = vadd.f32 %v1030, 1.0
        %v1032 = vmul.f32 %v1031, %v824
        %v1033 = vand.u32 2147483647, %v824
        %vm1034 = vcmp.lt.f32.partialorder %v1033, 0.0004427343
        %v1035 = vsel %vm1034, %v1032, %v1029
        %v1036 = vadd.f32 %v826, 1.0
        %v1037 = vlog2.pop %v1036
        %v1038 = vmul.f32 %v1037, 0.6931472
        %v1039 = vmul.f32 -0.5, %v826
        %v1040 = vadd.f32 %v1039, 1.0
        %v1041 = vmul.f32 %v1040, %v826
        %v1042 = vand.u32 2147483647, %v826
        %vm1043 = vcmp.lt.f32.partialorder %v1042, 0.0004427343
        %v1044 = vsel %vm1043, %v1041, %v1038
        %v1045 = vadd.f32 %v828, 1.0
        %v1046 = vlog2.pop %v1045
        %v1047 = vmul.f32 %v1046, 0.6931472
        %v1048 = vmul.f32 -0.5, %v828
        %v1049 = vadd.f32 %v1048, 1.0
        %v1050 = vmul.f32 %v1049, %v828
        %v1051 = vand.u32 2147483647, %v828
        %vm1052 = vcmp.lt.f32.partialorder %v1051, 0.0004427343
        %v1053 = vsel %vm1052, %v1050, %v1047
        %v1054 = vadd.f32 %v830, 1.0
        %v1055 = vlog2.pop %v1054
        %v1056 = vmul.f32 %v1055, 0.6931472
        %v1057 = vmul.f32 -0.5, %v830
        %v1058 = vadd.f32 %v1057, 1.0
        %v1059 = vmul.f32 %v1058, %v830
        %v1060 = vand.u32 2147483647, %v830
        %vm1061 = vcmp.lt.f32.partialorder %v1060, 0.0004427343
        %v1062 = vsel %vm1061, %v1059, %v1056
        %v1063 = vadd.f32 %v832, 1.0
        %v1064 = vlog2.pop %v1063
        %v1065 = vmul.f32 %v1064, 0.6931472
        %v1066 = vmul.f32 -0.5, %v832
        %v1067 = vadd.f32 %v1066, 1.0
        %v1068 = vmul.f32 %v1067, %v832
        %v1069 = vand.u32 2147483647, %v832
        %vm1070 = vcmp.lt.f32.partialorder %v1069, 0.0004427343
        %v1071 = vsel %vm1070, %v1068, %v1065
        %v1072 = vadd.f32 %v834, 1.0
        %v1073 = vlog2.pop %v1072
        %v1074 = vmul.f32 %v1073, 0.6931472
        %v1075 = vmul.f32 -0.5, %v834
        %v1076 = vadd.f32 %v1075, 1.0
        %v1077 = vmul.f32 %v1076, %v834
        %v1078 = vand.u32 2147483647, %v834
        %vm1079 = vcmp.lt.f32.partialorder %v1078, 0.0004427343
        %v1080 = vsel %vm1079, %v1077, %v1074
        %v1081 = vadd.f32 %v836, 1.0
        %v1082 = vlog2.pop %v1081
        %v1083 = vmul.f32 %v1082, 0.6931472
        %v1084 = vmul.f32 -0.5, %v836
        %v1085 = vadd.f32 %v1084, 1.0
        %v1086 = vmul.f32 %v1085, %v836
        %v1087 = vand.u32 2147483647, %v836
        %vm1088 = vcmp.lt.f32.partialorder %v1087, 0.0004427343
        %v1089 = vsel %vm1088, %v1086, %v1083
        %v1090 = vadd.f32 %v838, 1.0
        %v1091 = vlog2.pop %v1090
        %v1092 = vmul.f32 %v1091, 0.6931472
        %v1093 = vmul.f32 -0.5, %v838
        %v1094 = vadd.f32 %v1093, 1.0
        %v1095 = vmul.f32 %v1094, %v838
        %v1096 = vand.u32 2147483647, %v838
        %vm1097 = vcmp.lt.f32.partialorder %v1096, 0.0004427343
        %v1098 = vsel %vm1097, %v1095, %v1092
        %v1099 = vadd.f32 %v840, 1.0
        %v1100 = vlog2.pop %v1099
        %v1101 = vmul.f32 %v1100, 0.6931472
        %v1102 = vmul.f32 -0.5, %v840
        %v1103 = vadd.f32 %v1102, 1.0
        %v1104 = vmul.f32 %v1103, %v840
        %v1105 = vand.u32 2147483647, %v840
        %vm1106 = vcmp.lt.f32.partialorder %v1105, 0.0004427343
        %v1107 = vsel %vm1106, %v1104, %v1101
        %v1108 = vadd.f32 %v842, 1.0
        %v1109 = vlog2.pop %v1108
        %v1110 = vmul.f32 %v1109, 0.6931472
        %v1111 = vmul.f32 -0.5, %v842
        %v1112 = vadd.f32 %v1111, 1.0
        %v1113 = vmul.f32 %v1112, %v842
        %v1114 = vand.u32 2147483647, %v842
        %vm1115 = vcmp.lt.f32.partialorder %v1114, 0.0004427343
        %v1116 = vsel %vm1115, %v1113, %v1110
        %v1117 = vadd.f32 %v844, 1.0
        %v1118 = vlog2.pop %v1117
        %v1119 = vmul.f32 %v1118, 0.6931472
        %v1120 = vmul.f32 -0.5, %v844
        %v1121 = vadd.f32 %v1120, 1.0
        %v1122 = vmul.f32 %v1121, %v844
        %v1123 = vand.u32 2147483647, %v844
        %vm1124 = vcmp.lt.f32.partialorder %v1123, 0.0004427343
        %v1125 = vsel %vm1124, %v1122, %v1119
        %v1126 = vadd.f32 %v846, 1.0
        %v1127 = vlog2.pop %v1126
        %v1128 = vmul.f32 %v1127, 0.6931472
        %v1129 = vmul.f32 -0.5, %v846
        %v1130 = vadd.f32 %v1129, 1.0
        %v1131 = vmul.f32 %v1130, %v846
        %v1132 = vand.u32 2147483647, %v846
        %vm1133 = vcmp.lt.f32.partialorder %v1132, 0.0004427343
        %v1134 = vsel %vm1133, %v1131, %v1128
        %v1135 = vsel %vm719, %v618, %v855
        %v1136 = vsel %vm720, %v621, %v864
        %v1137 = vsel %vm721, %v624, %v873
        %v1138 = vsel %vm722, %v627, %v882
        %v1139 = vsel %vm723, %v630, %v891
        %v1140 = vsel %vm724, %v633, %v900
        %v1141 = vsel %vm725, %v636, %v909
        %v1142 = vsel %vm726, %v639, %v918
        %v1143 = vsel %vm727, %v642, %v927
        %v1144 = vsel %vm728, %v645, %v936
        %v1145 = vsel %vm729, %v648, %v945
        %v1146 = vsel %vm730, %v651, %v954
        %v1147 = vsel %vm731, %v654, %v963
        %v1148 = vsel %vm732, %v657, %v972
        %v1149 = vsel %vm733, %v660, %v981
        %v1150 = vsel %vm734, %v663, %v990
        %v1151 = vsel %vm735, %v666, %v999
        %v1152 = vsel %vm736, %v669, %v1008
        %v1153 = vsel %vm737, %v672, %v1017
        %v1154 = vsel %vm738, %v675, %v1026
        %v1155 = vsel %vm739, %v678, %v1035
        %v1156 = vsel %vm740, %v681, %v1044
        %v1157 = vsel %vm741, %v684, %v1053
        %v1158 = vsel %vm742, %v687, %v1062
        %v1159 = vsel %vm743, %v690, %v1071
        %v1160 = vsel %vm744, %v693, %v1080
        %v1161 = vsel %vm745, %v696, %v1089
        %v1162 = vsel %vm746, %v699, %v1098
        %v1163 = vsel %vm747, %v702, %v1107
        %v1164 = vsel %vm748, %v705, %v1116
        %v1165 = vsel %vm749, %v708, %v1125
        %v1166 = vsel %vm750, %v711, %v1134
        %v1167 = vsel %vm717, %v1135, %v618
        %v1168 = vsel %vm717, %v1136, %v621
        %v1169 = vsel %vm717, %v1137, %v624
        %v1170 = vsel %vm717, %v1138, %v627
        %v1171 = vsel %vm717, %v1139, %v630
        %v1172 = vsel %vm717, %v1140, %v633
        %v1173 = vsel %vm717, %v1141, %v636
        %v1174 = vsel %vm717, %v1142, %v639
        %v1175 = vsel %vm717, %v1143, %v642
        %v1176 = vsel %vm717, %v1144, %v645
        %v1177 = vsel %vm717, %v1145, %v648
        %v1178 = vsel %vm717, %v1146, %v651
        %v1179 = vsel %vm717, %v1147, %v654
        %v1180 = vsel %vm717, %v1148, %v657
        %v1181 = vsel %vm717, %v1149, %v660
        %v1182 = vsel %vm717, %v1150, %v663
        %v1183 = vsel %vm717, %v1151, %v666
        %v1184 = vsel %vm717, %v1152, %v669
        %v1185 = vsel %vm717, %v1153, %v672
        %v1186 = vsel %vm717, %v1154, %v675
        %v1187 = vsel %vm717, %v1155, %v678
        %v1188 = vsel %vm717, %v1156, %v681
        %v1189 = vsel %vm717, %v1157, %v684
        %v1190 = vsel %vm717, %v1158, %v687
        %v1191 = vsel %vm717, %v1159, %v690
        %v1192 = vsel %vm717, %v1160, %v693
        %v1193 = vsel %vm717, %v1161, %v696
        %v1194 = vsel %vm717, %v1162, %v699
        %v1195 = vsel %vm717, %v1163, %v702
        %v1196 = vsel %vm717, %v1164, %v705
        %v1197 = vsel %vm717, %v1165, %v708
        %v1198 = vsel %vm717, %v1166, %v711
        %1199 = vrot.lane.b32.xlu0 %v1167, 120
        %v1200 = vpop.permute.xlu0 %1199
        %1201 = vrot.lane.b32.xlu0 %v1168, 120
        %v1202 = vpop.permute.xlu0 %1201
        %1203 = vrot.lane.b32.xlu0 %v1169, 120
        %v1204 = vpop.permute.xlu0 %1203
        %1205 = vrot.lane.b32.xlu0 %v1170, 120
        %v1206 = vpop.permute.xlu0 %1205
        %1207 = vrot.lane.b32.xlu0 %v1171, 120
        %v1208 = vpop.permute.xlu0 %1207
        %1209 = vrot.lane.b32.xlu0 %v1172, 120
        %v1210 = vpop.permute.xlu0 %1209
        %1211 = vrot.lane.b32.xlu0 %v1173, 120
        %v1212 = vpop.permute.xlu0 %1211
        %1213 = vrot.lane.b32.xlu0 %v1174, 120
        %v1214 = vpop.permute.xlu0 %1213
        %1215 = vrot.lane.b32.xlu0 %v1175, 120
        %v1216 = vpop.permute.xlu0 %1215
        %1217 = vrot.lane.b32.xlu0 %v1176, 120
        %v1218 = vpop.permute.xlu0 %1217
        %1219 = vrot.lane.b32.xlu0 %v1177, 120
        %v1220 = vpop.permute.xlu0 %1219
        %1221 = vrot.lane.b32.xlu0 %v1178, 120
        %v1222 = vpop.permute.xlu0 %1221
        %1223 = vrot.lane.b32.xlu0 %v1179, 120
        %v1224 = vpop.permute.xlu0 %1223
        %1225 = vrot.lane.b32.xlu0 %v1180, 120
        %v1226 = vpop.permute.xlu0 %1225
        %1227 = vrot.lane.b32.xlu0 %v1181, 120
        %v1228 = vpop.permute.xlu0 %1227
        %1229 = vrot.lane.b32.xlu0 %v1182, 120
        %v1230 = vpop.permute.xlu0 %1229
        %1231 = vrot.lane.b32.xlu0 %v1183, 120
        %v1232 = vpop.permute.xlu0 %1231
        %1233 = vrot.lane.b32.xlu0 %v1184, 120
        %v1234 = vpop.permute.xlu0 %1233
        %1235 = vrot.lane.b32.xlu0 %v1185, 120
        %v1236 = vpop.permute.xlu0 %1235
        %1237 = vrot.lane.b32.xlu0 %v1186, 120
        %v1238 = vpop.permute.xlu0 %1237
        %1239 = vrot.lane.b32.xlu0 %v1187, 120
        %v1240 = vpop.permute.xlu0 %1239
        %1241 = vrot.lane.b32.xlu0 %v1188, 120
        %v1242 = vpop.permute.xlu0 %1241
        %1243 = vrot.lane.b32.xlu0 %v1189, 120
        %v1244 = vpop.permute.xlu0 %1243
        %1245 = vrot.lane.b32.xlu0 %v1190, 120
        %v1246 = vpop.permute.xlu0 %1245
        %1247 = vrot.lane.b32.xlu0 %v1191, 120
        %v1248 = vpop.permute.xlu0 %1247
        %1249 = vrot.lane.b32.xlu0 %v1192, 120
        %v1250 = vpop.permute.xlu0 %1249
        %1251 = vrot.lane.b32.xlu0 %v1193, 120
        %v1252 = vpop.permute.xlu0 %1251
        %1253 = vrot.lane.b32.xlu0 %v1194, 120
        %v1254 = vpop.permute.xlu0 %1253
        %1255 = vrot.lane.b32.xlu0 %v1195, 120
        %v1256 = vpop.permute.xlu0 %1255
        %1257 = vrot.lane.b32.xlu0 %v1196, 120
        %v1258 = vpop.permute.xlu0 %1257
        %1259 = vrot.lane.b32.xlu0 %v1197, 120
        %v1260 = vpop.permute.xlu0 %1259
        %1261 = vrot.lane.b32.xlu0 %v1198, 120
        %v1262 = vpop.permute.xlu0 %1261
        %1263 = vrot.lane.b32.xlu0 %v1167, 112
        %v1264 = vpop.permute.xlu0 %1263
        %1265 = vrot.lane.b32.xlu0 %v1168, 112
        %v1266 = vpop.permute.xlu0 %1265
        %1267 = vrot.lane.b32.xlu0 %v1169, 112
        %v1268 = vpop.permute.xlu0 %1267
        %1269 = vrot.lane.b32.xlu0 %v1170, 112
        %v1270 = vpop.permute.xlu0 %1269
        %1271 = vrot.lane.b32.xlu0 %v1171, 112
        %v1272 = vpop.permute.xlu0 %1271
        %1273 = vrot.lane.b32.xlu0 %v1172, 112
        %v1274 = vpop.permute.xlu0 %1273
        %1275 = vrot.lane.b32.xlu0 %v1173, 112
        %v1276 = vpop.permute.xlu0 %1275
        %1277 = vrot.lane.b32.xlu0 %v1174, 112
        %v1278 = vpop.permute.xlu0 %1277
        %1279 = vrot.lane.b32.xlu0 %v1175, 112
        %v1280 = vpop.permute.xlu0 %1279
        %1281 = vrot.lane.b32.xlu0 %v1176, 112
        %v1282 = vpop.permute.xlu0 %1281
        %1283 = vrot.lane.b32.xlu0 %v1177, 112
        %v1284 = vpop.permute.xlu0 %1283
        %1285 = vrot.lane.b32.xlu0 %v1178, 112
        %v1286 = vpop.permute.xlu0 %1285
        %1287 = vrot.lane.b32.xlu0 %v1179, 112
        %v1288 = vpop.permute.xlu0 %1287
        %1289 = vrot.lane.b32.xlu0 %v1180, 112
        %v1290 = vpop.permute.xlu0 %1289
        %1291 = vrot.lane.b32.xlu0 %v1181, 112
        %v1292 = vpop.permute.xlu0 %1291
        %1293 = vrot.lane.b32.xlu0 %v1182, 112
        %v1294 = vpop.permute.xlu0 %1293
        %1295 = vrot.lane.b32.xlu0 %v1183, 112
        %v1296 = vpop.permute.xlu0 %1295
        %1297 = vrot.lane.b32.xlu0 %v1184, 112
        %v1298 = vpop.permute.xlu0 %1297
        %1299 = vrot.lane.b32.xlu0 %v1185, 112
        %v1300 = vpop.permute.xlu0 %1299
        %1301 = vrot.lane.b32.xlu0 %v1186, 112
        %v1302 = vpop.permute.xlu0 %1301
        %1303 = vrot.lane.b32.xlu0 %v1187, 112
        %v1304 = vpop.permute.xlu0 %1303
        %1305 = vrot.lane.b32.xlu0 %v1188, 112
        %v1306 = vpop.permute.xlu0 %1305
        %1307 = vrot.lane.b32.xlu0 %v1189, 112
        %v1308 = vpop.permute.xlu0 %1307
        %1309 = vrot.lane.b32.xlu0 %v1190, 112
        %v1310 = vpop.permute.xlu0 %1309
        %1311 = vrot.lane.b32.xlu0 %v1191, 112
        %v1312 = vpop.permute.xlu0 %1311
        %1313 = vrot.lane.b32.xlu0 %v1192, 112
        %v1314 = vpop.permute.xlu0 %1313
        %1315 = vrot.lane.b32.xlu0 %v1193, 112
        %v1316 = vpop.permute.xlu0 %1315
        %1317 = vrot.lane.b32.xlu0 %v1194, 112
        %v1318 = vpop.permute.xlu0 %1317
        %1319 = vrot.lane.b32.xlu0 %v1195, 112
        %v1320 = vpop.permute.xlu0 %1319
        %1321 = vrot.lane.b32.xlu0 %v1196, 112
        %v1322 = vpop.permute.xlu0 %1321
        %1323 = vrot.lane.b32.xlu0 %v1197, 112
        %v1324 = vpop.permute.xlu0 %1323
        %1325 = vrot.lane.b32.xlu0 %v1198, 112
        %v1326 = vpop.permute.xlu0 %1325
        %1327 = vrot.lane.b32.xlu0 %v224, 88
        %v1328 = vpop.permute.xlu0 %1327
        %1329 = vrot.lane.b32.xlu0 %v225, 88
        %v1330 = vpop.permute.xlu0 %1329
        %1331 = vrot.lane.b32.xlu0 %v226, 88
        %v1332 = vpop.permute.xlu0 %1331
        %1333 = vrot.lane.b32.xlu0 %v227, 88
        %v1334 = vpop.permute.xlu0 %1333
        %1335 = vrot.lane.b32.xlu0 %v228, 88
        %v1336 = vpop.permute.xlu0 %1335
        %1337 = vrot.lane.b32.xlu0 %v229, 88
        %v1338 = vpop.permute.xlu0 %1337
        %1339 = vrot.lane.b32.xlu0 %v230, 88
        %v1340 = vpop.permute.xlu0 %1339
        %1341 = vrot.lane.b32.xlu0 %v231, 88
        %v1342 = vpop.permute.xlu0 %1341
        %1343 = vrot.lane.b32.xlu0 %v232, 88
        %v1344 = vpop.permute.xlu0 %1343
        %1345 = vrot.lane.b32.xlu0 %v233, 88
        %v1346 = vpop.permute.xlu0 %1345
        %1347 = vrot.lane.b32.xlu0 %v234, 88
        %v1348 = vpop.permute.xlu0 %1347
        %1349 = vrot.lane.b32.xlu0 %v235, 88
        %v1350 = vpop.permute.xlu0 %1349
        %1351 = vrot.lane.b32.xlu0 %v236, 88
        %v1352 = vpop.permute.xlu0 %1351
        %1353 = vrot.lane.b32.xlu0 %v237, 88
        %v1354 = vpop.permute.xlu0 %1353
        %1355 = vrot.lane.b32.xlu0 %v238, 88
        %v1356 = vpop.permute.xlu0 %1355
        %1357 = vrot.lane.b32.xlu0 %v239, 88
        %v1358 = vpop.permute.xlu0 %1357
        %1359 = vrot.lane.b32.xlu0 %v240, 88
        %v1360 = vpop.permute.xlu0 %1359
        %1361 = vrot.lane.b32.xlu0 %v241, 88
        %v1362 = vpop.permute.xlu0 %1361
        %1363 = vrot.lane.b32.xlu0 %v242, 88
        %v1364 = vpop.permute.xlu0 %1363
        %1365 = vrot.lane.b32.xlu0 %v243, 88
        %v1366 = vpop.permute.xlu0 %1365
        %1367 = vrot.lane.b32.xlu0 %v244, 88
        %v1368 = vpop.permute.xlu0 %1367
        %1369 = vrot.lane.b32.xlu0 %v245, 88
        %v1370 = vpop.permute.xlu0 %1369
        %1371 = vrot.lane.b32.xlu0 %v246, 88
        %v1372 = vpop.permute.xlu0 %1371
        %1373 = vrot.lane.b32.xlu0 %v247, 88
        %v1374 = vpop.permute.xlu0 %1373
        %1375 = vrot.lane.b32.xlu0 %v248, 88
        %v1376 = vpop.permute.xlu0 %1375
        %1377 = vrot.lane.b32.xlu0 %v249, 88
        %v1378 = vpop.permute.xlu0 %1377
        %1379 = vrot.lane.b32.xlu0 %v250, 88
        %v1380 = vpop.permute.xlu0 %1379
        %1381 = vrot.lane.b32.xlu0 %v251, 88
        %v1382 = vpop.permute.xlu0 %1381
        %1383 = vrot.lane.b32.xlu0 %v252, 88
        %v1384 = vpop.permute.xlu0 %1383
        %1385 = vrot.lane.b32.xlu0 %v253, 88
        %v1386 = vpop.permute.xlu0 %1385
        %1387 = vrot.lane.b32.xlu0 %v254, 88
        %v1388 = vpop.permute.xlu0 %1387
        %1389 = vrot.lane.b32.xlu0 %v255, 88
        %v1390 = vpop.permute.xlu0 %1389
        %v1391 = vmul.f32 %v1264, 0.5
        %v1392 = vmul.f32 %v1266, 0.5
        %v1393 = vmul.f32 %v1268, 0.5
        %v1394 = vmul.f32 %v1270, 0.5
        %v1395 = vmul.f32 %v1272, 0.5
        %v1396 = vmul.f32 %v1274, 0.5
        %v1397 = vmul.f32 %v1276, 0.5
        %v1398 = vmul.f32 %v1278, 0.5
        %v1399 = vmul.f32 %v1280, 0.5
        %v1400 = vmul.f32 %v1282, 0.5
        %v1401 = vmul.f32 %v1284, 0.5
        %v1402 = vmul.f32 %v1286, 0.5
        %v1403 = vmul.f32 %v1288, 0.5
        %v1404 = vmul.f32 %v1290, 0.5
        %v1405 = vmul.f32 %v1292, 0.5
        %v1406 = vmul.f32 %v1294, 0.5
        %v1407 = vmul.f32 %v1296, 0.5
        %v1408 = vmul.f32 %v1298, 0.5
        %v1409 = vmul.f32 %v1300, 0.5
        %v1410 = vmul.f32 %v1302, 0.5
        %v1411 = vmul.f32 %v1304, 0.5
        %v1412 = vmul.f32 %v1306, 0.5
        %v1413 = vmul.f32 %v1308, 0.5
        %v1414 = vmul.f32 %v1310, 0.5
        %v1415 = vmul.f32 %v1312, 0.5
        %v1416 = vmul.f32 %v1314, 0.5
        %v1417 = vmul.f32 %v1316, 0.5
        %v1418 = vmul.f32 %v1318, 0.5
        %v1419 = vmul.f32 %v1320, 0.5
        %v1420 = vmul.f32 %v1322, 0.5
        %v1421 = vmul.f32 %v1324, 0.5
        %v1422 = vmul.f32 %v1326, 0.5
        %v1423 = vmul.f32 %v1391, 1.442695
        %v1424 = vpow.pop %v1423
        %v1425 = vmul.f32 %v1392, 1.442695
        %v1426 = vpow.pop %v1425
        %v1427 = vmul.f32 %v1393, 1.442695
        %v1428 = vpow.pop %v1427
        %v1429 = vmul.f32 %v1394, 1.442695
        %v1430 = vpow.pop %v1429
        %v1431 = vmul.f32 %v1395, 1.442695
        %v1432 = vpow.pop %v1431
        %v1433 = vmul.f32 %v1396, 1.442695
        %v1434 = vpow.pop %v1433
        %v1435 = vmul.f32 %v1397, 1.442695
        %v1436 = vpow.pop %v1435
        %v1437 = vmul.f32 %v1398, 1.442695
        %v1438 = vpow.pop %v1437
        %v1439 = vmul.f32 %v1399, 1.442695
        %v1440 = vpow.pop %v1439
        %v1441 = vmul.f32 %v1400, 1.442695
        %v1442 = vpow.pop %v1441
        %v1443 = vmul.f32 %v1401, 1.442695
        %v1444 = vpow.pop %v1443
        %v1445 = vmul.f32 %v1402, 1.442695
        %v1446 = vpow.pop %v1445
        %v1447 = vmul.f32 %v1403, 1.442695
        %v1448 = vpow.pop %v1447
        %v1449 = vmul.f32 %v1404, 1.442695
        %v1450 = vpow.pop %v1449
        %v1451 = vmul.f32 %v1405, 1.442695
        %v1452 = vpow.pop %v1451
        %v1453 = vmul.f32 %v1406, 1.442695
        %v1454 = vpow.pop %v1453
        %v1455 = vmul.f32 %v1407, 1.442695
        %v1456 = vpow.pop %v1455
        %v1457 = vmul.f32 %v1408, 1.442695
        %v1458 = vpow.pop %v1457
        %v1459 = vmul.f32 %v1409, 1.442695
        %v1460 = vpow.pop %v1459
        %v1461 = vmul.f32 %v1410, 1.442695
        %v1462 = vpow.pop %v1461
        %v1463 = vmul.f32 %v1411, 1.442695
        %v1464 = vpow.pop %v1463
        %v1465 = vmul.f32 %v1412, 1.442695
        %v1466 = vpow.pop %v1465
        %v1467 = vmul.f32 %v1413, 1.442695
        %v1468 = vpow.pop %v1467
        %v1469 = vmul.f32 %v1414, 1.442695
        %v1470 = vpow.pop %v1469
        %v1471 = vmul.f32 %v1415, 1.442695
        %v1472 = vpow.pop %v1471
        %v1473 = vmul.f32 %v1416, 1.442695
        %v1474 = vpow.pop %v1473
        %v1475 = vmul.f32 %v1417, 1.442695
        %v1476 = vpow.pop %v1475
        %v1477 = vmul.f32 %v1418, 1.442695
        %v1478 = vpow.pop %v1477
        %v1479 = vmul.f32 %v1419, 1.442695
        %v1480 = vpow.pop %v1479
        %v1481 = vmul.f32 %v1420, 1.442695
        %v1482 = vpow.pop %v1481
        %v1483 = vmul.f32 %v1421, 1.442695
        %v1484 = vpow.pop %v1483
        %v1485 = vmul.f32 %v1422, 1.442695
        %v1486 = vpow.pop %v1485
        %v1487 = vmul.f32 %v1424, %v1328
        %v1488 = vmul.f32 %v1426, %v1330
        %v1489 = vmul.f32 %v1428, %v1332
        %v1490 = vmul.f32 %v1430, %v1334
        %v1491 = vmul.f32 %v1432, %v1336
        %v1492 = vmul.f32 %v1434, %v1338
        %v1493 = vmul.f32 %v1436, %v1340
        %v1494 = vmul.f32 %v1438, %v1342
        %v1495 = vmul.f32 %v1440, %v1344
        %v1496 = vmul.f32 %v1442, %v1346
        %v1497 = vmul.f32 %v1444, %v1348
        %v1498 = vmul.f32 %v1446, %v1350
        %v1499 = vmul.f32 %v1448, %v1352
        %v1500 = vmul.f32 %v1450, %v1354
        %v1501 = vmul.f32 %v1452, %v1356
        %v1502 = vmul.f32 %v1454, %v1358
        %v1503 = vmul.f32 %v1456, %v1360
        %v1504 = vmul.f32 %v1458, %v1362
        %v1505 = vmul.f32 %v1460, %v1364
        %v1506 = vmul.f32 %v1462, %v1366
        %v1507 = vmul.f32 %v1464, %v1368
        %v1508 = vmul.f32 %v1466, %v1370
        %v1509 = vmul.f32 %v1468, %v1372
        %v1510 = vmul.f32 %v1470, %v1374
        %v1511 = vmul.f32 %v1472, %v1376
        %v1512 = vmul.f32 %v1474, %v1378
        %v1513 = vmul.f32 %v1476, %v1380
        %v1514 = vmul.f32 %v1478, %v1382
        %v1515 = vmul.f32 %v1480, %v1384
        %v1516 = vmul.f32 %v1482, %v1386
        %v1517 = vmul.f32 %v1484, %v1388
        %v1518 = vmul.f32 %v1486, %v1390
        %v1519 = vadd.f32 %v1200, %v1487
        %v1520 = vadd.f32 %v1202, %v1488
        %v1521 = vadd.f32 %v1204, %v1489
        %v1522 = vadd.f32 %v1206, %v1490
        %v1523 = vadd.f32 %v1208, %v1491
        %v1524 = vadd.f32 %v1210, %v1492
        %v1525 = vadd.f32 %v1212, %v1493
        %v1526 = vadd.f32 %v1214, %v1494
        %v1527 = vadd.f32 %v1216, %v1495
        %v1528 = vadd.f32 %v1218, %v1496
        %v1529 = vadd.f32 %v1220, %v1497
        %v1530 = vadd.f32 %v1222, %v1498
        %v1531 = vadd.f32 %v1224, %v1499
        %v1532 = vadd.f32 %v1226, %v1500
        %v1533 = vadd.f32 %v1228, %v1501
        %v1534 = vadd.f32 %v1230, %v1502
        %v1535 = vadd.f32 %v1232, %v1503
        %v1536 = vadd.f32 %v1234, %v1504
        %v1537 = vadd.f32 %v1236, %v1505
        %v1538 = vadd.f32 %v1238, %v1506
        %v1539 = vadd.f32 %v1240, %v1507
        %v1540 = vadd.f32 %v1242, %v1508
        %v1541 = vadd.f32 %v1244, %v1509
        %v1542 = vadd.f32 %v1246, %v1510
        %v1543 = vadd.f32 %v1248, %v1511
        %v1544 = vadd.f32 %v1250, %v1512
        %v1545 = vadd.f32 %v1252, %v1513
        %v1546 = vadd.f32 %v1254, %v1514
        %v1547 = vadd.f32 %v1256, %v1515
        %v1548 = vadd.f32 %v1258, %v1516
        %v1549 = vadd.f32 %v1260, %v1517
        %v1550 = vadd.f32 %v1262, %v1518
        %v1551 = vsel %vm718, %v1519, %v1167
        %v1552 = vsel %vm718, %v1520, %v1168
        %v1553 = vsel %vm718, %v1521, %v1169
        %v1554 = vsel %vm718, %v1522, %v1170
        %v1555 = vsel %vm718, %v1523, %v1171
        %v1556 = vsel %vm718, %v1524, %v1172
        %v1557 = vsel %vm718, %v1525, %v1173
        %v1558 = vsel %vm718, %v1526, %v1174
        %v1559 = vsel %vm718, %v1527, %v1175
        %v1560 = vsel %vm718, %v1528, %v1176
        %v1561 = vsel %vm718, %v1529, %v1177
        %v1562 = vsel %vm718, %v1530, %v1178
        %v1563 = vsel %vm718, %v1531, %v1179
        %v1564 = vsel %vm718, %v1532, %v1180
        %v1565 = vsel %vm718, %v1533, %v1181
        %v1566 = vsel %vm718, %v1534, %v1182
        %v1567 = vsel %vm718, %v1535, %v1183
        %v1568 = vsel %vm718, %v1536, %v1184
        %v1569 = vsel %vm718, %v1537, %v1185
        %v1570 = vsel %vm718, %v1538, %v1186
        %v1571 = vsel %vm718, %v1539, %v1187
        %v1572 = vsel %vm718, %v1540, %v1188
        %v1573 = vsel %vm718, %v1541, %v1189
        %v1574 = vsel %vm718, %v1542, %v1190
        %v1575 = vsel %vm718, %v1543, %v1191
        %v1576 = vsel %vm718, %v1544, %v1192
        %v1577 = vsel %vm718, %v1545, %v1193
        %v1578 = vsel %vm718, %v1546, %v1194
        %v1579 = vsel %vm718, %v1547, %v1195
        %v1580 = vsel %vm718, %v1548, %v1196
        %v1581 = vsel %vm718, %v1549, %v1197
        %v1582 = vsel %vm718, %v1550, %v1198
        %1583 = vst [vmem:[%s221] sm:$0xff] %v1551
        %1584 = vst [vmem:[%s221 + $0x8] sm:$0xff] %v1552
        %1585 = vst [vmem:[%s221 + $0x10] sm:$0xff] %v1553
        %1586 = vst [vmem:[%s221 + $0x18] sm:$0xff] %v1554
        %1587 = vst [vmem:[%s221 + $0x20] sm:$0xff] %v1555
        %1588 = vst [vmem:[%s221 + $0x28] sm:$0xff] %v1556
        %1589 = vst [vmem:[%s221 + $0x30] sm:$0xff] %v1557
        %1590 = vst [vmem:[%s221 + $0x38] sm:$0xff] %v1558
        %1591 = vst [vmem:[%s221 + $0x40] sm:$0xff] %v1559
        %1592 = vst [vmem:[%s221 + $0x48] sm:$0xff] %v1560
        %1593 = vst [vmem:[%s221 + $0x50] sm:$0xff] %v1561
        %1594 = vst [vmem:[%s221 + $0x58] sm:$0xff] %v1562
        %1595 = vst [vmem:[%s221 + $0x60] sm:$0xff] %v1563
        %1596 = vst [vmem:[%s221 + $0x68] sm:$0xff] %v1564
        %1597 = vst [vmem:[%s221 + $0x70] sm:$0xff] %v1565
        %1598 = vst [vmem:[%s221 + $0x78] sm:$0xff] %v1566
        %1599 = vst [vmem:[%s221 + $0x80] sm:$0xff] %v1567
        %1600 = vst [vmem:[%s221 + $0x88] sm:$0xff] %v1568
        %1601 = vst [vmem:[%s221 + $0x90] sm:$0xff] %v1569
        %1602 = vst [vmem:[%s221 + $0x98] sm:$0xff] %v1570
        %1603 = vst [vmem:[%s221 + $0xa0] sm:$0xff] %v1571
        %1604 = vst [vmem:[%s221 + $0xa8] sm:$0xff] %v1572
        %1605 = vst [vmem:[%s221 + $0xb0] sm:$0xff] %v1573
        %1606 = vst [vmem:[%s221 + $0xb8] sm:$0xff] %v1574
        %1607 = vst [vmem:[%s221 + $0xc0] sm:$0xff] %v1575
        %1608 = vst [vmem:[%s221 + $0xc8] sm:$0xff] %v1576
        %1609 = vst [vmem:[%s221 + $0xd0] sm:$0xff] %v1577
        %1610 = vst [vmem:[%s221 + $0xd8] sm:$0xff] %v1578
        %1611 = vst [vmem:[%s221 + $0xe0] sm:$0xff] %v1579
        %1612 = vst [vmem:[%s221 + $0xe8] sm:$0xff] %v1580
        %1613 = vst [vmem:[%s221 + $0xf0] sm:$0xff] %v1581
        %1614 = vst [vmem:[%s221 + $0xf8] sm:$0xff] %v1582
        %s1615 = sand.u32 %s97, 1
        %s1616 = scalar_lea.sflag [#allocation4], %s1615
        %s1617 = sand.u32 %s97, 1
        %s1618 = smul.addr %s1617, 256
        %s1619 = scalar_lea.vmem [#allocation8], %s1618
        // Predicated region
        $region45: #{tpu_custom_call.1} parent=31 // pred_check
          %p1620 = pneg %p107
        $region46: #{tpu_custom_call.1} parent=31 // pred_check_branch
          %1622 = sbr.rel (%p1620) target = $region48
        $region47: #{tpu_custom_call.1} parent=31 // pred_region
          %s1623 = smul.u32 32, %s21
          %1625 = vsyncadd %s1616, 0
          %s1626 = smul.addr %s1623, 8
          %s1627 = scalar_lea.hbm %s3, %s1626
          %s1628 = sshll.u32 %s1619, 4
          %s1629 = int_to_ptr.vmem [resolvable:$true] %s1628
          %s1630 = sshll.u32 %s1627, 4
          %s1631 = int_to_ptr.hbm [resolvable:$true] %s1630
          %1636 = dma.vmem_to_hbm [thread:$0]  %s1629, 4096, %s1631, %s1616, 128, 128, 8
        $region48: #{tpu_custom_call.1} parent=31 // pred_fallthru
          _
      $region32: #{tpu_custom_call.1} parent=5 // pred_fallthru
        _
      %p1637 = scmp.le.s32.totalorder 2, %s16
      // Predicated region
      $region49: #{tpu_custom_call.1} parent=5 // pred_check
        %p1638 = pneg %p1637
      $region50: #{tpu_custom_call.1} parent=5 // pred_check_branch
        %1640 = sbr.rel (%p1638) target = $region52
      $region51: #{tpu_custom_call.1} parent=5 // pred_region
        %s1641 = ssub.s32 %s16, 2
        // Predicated region
        $region53: #{tpu_custom_call.1} parent=51 // pred_check
          %p1642 = pneg %p113
        $region54: #{tpu_custom_call.1} parent=51 // pred_check_branch
          %1644 = sbr.rel (%p1642) target = $region56
        $region55: #{tpu_custom_call.1} parent=51 // pred_region
          %s1645 = sand.u32 %s98, 1
          %s1646 = scalar_lea.sflag [#allocation4], %s1645
          %s1647 = sand.u32 %s98, 1
          %s1648 = smul.addr %s1647, 256
          %s1649 = scalar_lea.vmem [#allocation8], %s1648
          %1651 = dma.done %s1646, 4096
        $region56: #{tpu_custom_call.1} parent=51 // pred_fallthru
          _
      $region52: #{tpu_custom_call.1} parent=5 // pred_fallthru
        _
    $region6: #{tpu_custom_call.1} parent=1 // loop_footer
      %s20 = sadd.s32 1, %s16
    $region7: #{tpu_custom_call.1} parent=1 // loop_footer_branch
      %15 = sbr.rel target = $region3
    $region8: #{tpu_custom_call.1} parent=1 // loop_exit
      _
    %1652 = vsyncpa [#allocation3], 1
    %s1653 = scalar_lea.sflag [#allocation3], 1
    %1654 = vsyncpa %s1653, 1
    %1655 = vsyncpa [#allocation6], 1
    %1656 = vsyncpa [#allocation4], 1
    %s1657 = scalar_lea.sflag [#allocation4], 1
    %1658 = vsyncpa %s1657, 1

</llo_original>
